<compile_context>
chip_gen: v7x
topology: tpu7x:2x2x1
jax: 0.10.0
libtpu: 0.0.40
codegen_flags: <defaults>
</compile_context>

<pallas_src>
import functools

import jax
import jax.numpy as jnp
from jax.experimental import pallas as pl
from jax.experimental.pallas import tpu as pltpu


# ---------------------------------------------------------------------------
# Kernels
# ---------------------------------------------------------------------------

def _se_fused_kernel(x_ref, w1t_ref, b1_ref, w2t_ref, b2_ref, o_ref, *, inv_hw):
    """Single-pass SE: pool + excite + scale for a (TN, C, HW) batch tile."""
    x = x_ref[...].astype(jnp.float32)                           # (TN, C, HW)

    # Squeeze: global average pool.  Block last dim == full logical H*W, so
    # the reduction only covers real elements (compiler masks layout padding).
    pooled = jnp.sum(x, axis=2) * inv_hw                         # (TN, C)

    # Excite: batched 1x1-conv GEMMs + bias, ReLU, sigmoid gate.
    h = jnp.dot(pooled, w1t_ref[...],
                preferred_element_type=jnp.float32) + b1_ref[...]
    h = jnp.maximum(h, 0.0)                                      # (TN, C_rd)
    g = jnp.dot(h, w2t_ref[...],
                preferred_element_type=jnp.float32) + b2_ref[...]
    g = jax.nn.sigmoid(g)                                        # (TN, C)

    # Scale: broadcast per-(n, c) gate across the lane-dense spatial axis.
    o_ref[...] = (x * g[:, :, None]).astype(o_ref.dtype)


def _se_gate_kernel(x_ref, w1t_ref, b1_ref, w2t_ref, b2_ref, gate_ref, acc_ref,
                    *, hw, ts, inv_hw):
    """Phase 1 of the spatially-tiled path: accumulate the pooled sum over
    spatial tiles, compute the sigmoid gate on the last tile."""
    s = pl.program_id(1)

    @pl.when(s == 0)
    def _():
        acc_ref[...] = jnp.zeros_like(acc_ref)

    x = x_ref[...].astype(jnp.float32)                           # (TN, C, TS)
    # Mask lanes past the true H*W extent: the last spatial tile may be
    # partial and out-of-bounds lanes are NOT zero-filled on TPU.
    lane = jax.lax.broadcasted_iota(jnp.int32, x.shape, 2)
    x = jnp.where(lane < (hw - s * ts), x, 0.0)
    acc_ref[...] += jnp.sum(x, axis=2)                           # (TN, C)

    @pl.when(s == pl.num_programs(1) - 1)
    def _():
        pooled = acc_ref[...] * inv_hw
        h = jnp.dot(pooled, w1t_ref[...],
                    preferred_element_type=jnp.float32) + b1_ref[...]
        h = jnp.maximum(h, 0.0)
        g = jnp.dot(h, w2t_ref[...],
                    preferred_element_type=jnp.float32) + b2_ref[...]
        gate_ref[...] = jax.nn.sigmoid(g)[:, :, None]            # (TN, C, 1)


def _se_scale_kernel(x_ref, gate_ref, o_ref):
    """Phase 2 of the spatially-tiled path: rescale one (TN, C, TS) tile."""
    g = gate_ref[...]                                            # (TN, C, 1)
    o_ref[...] = (x_ref[...].astype(jnp.float32) * g).astype(o_ref.dtype)


# ---------------------------------------------------------------------------
# Tiling heuristics
# ---------------------------------------------------------------------------

def _default_vmem_limit_bytes():
    """~75% of the chip's physical VMEM, capped at 96 MiB (v5e/v6e: 128 MiB
    physical -> 96 MiB; v7x: 64 MiB per TensorCore -> 48 MiB)."""
    try:
        cap = int(pltpu.get_tpu_info().vmem_capacity_bytes)
    except Exception:
        cap = 64 * 1024 * 1024          # conservative fallback (v7x per-TC)
    return max(32 * 1024 * 1024, min(cap * 3 // 4, 96 * 1024 * 1024))


def _choose_batch_tile(n, bytes_per_sample, budget_bytes,
                       min_block_bytes=2 * 1024 * 1024):
    """Largest batch tile (divisor of n) whose double-buffered in+out blocks
    fit the budget.  Prefer >=2 grid steps (pipelining + v7x 2-TC sharding)
    unless that would shrink the x block below min_block_bytes."""
    max_tn = max(1, budget_bytes // (4 * bytes_per_sample))
    fitting = [d for d in range(1, n + 1) if n % d == 0 and d <= max_tn]
    best_any = max(fitting)
    multi = [d for d in fitting if n // d >= 2]
    if multi:
        best_multi = max(multi)
        if best_multi == best_any or best_multi * bytes_per_sample >= min_block_bytes:
            return best_multi
    return best_any


# ---------------------------------------------------------------------------
# Pallas-call wrappers
# ---------------------------------------------------------------------------

def _se_fused(x_flat, w1t, b1, w2t, b2, *, budget, vmem_limit):
    N, C, HW = x_flat.shape
    C_rd = w1t.shape[1]
    itemsize = x_flat.dtype.itemsize
    TN = _choose_batch_tile(N, C * HW * itemsize, budget)

    cost = pl.CostEstimate(
        flops=int(2 * N * C * HW + 4 * N * C * C_rd),
        transcendentals=int(N * C),
        bytes_accessed=int(2 * N * C * HW * itemsize + (2 * C * C_rd + C + C_rd) * 4),
    )

    return pl.pallas_call(
        functools.partial(_se_fused_kernel, inv_hw=1.0 / HW),
        out_shape=jax.ShapeDtypeStruct((N, C, HW), x_flat.dtype),
        grid_spec=pltpu.PrefetchScalarGridSpec(
            num_scalar_prefetch=0,
            grid=(N // TN,),
            in_specs=[
                pl.BlockSpec((TN, C, HW), lambda n: (n, 0, 0)),   # x tile
                pl.BlockSpec((C, C_rd), lambda n: (0, 0)),        # reduce W^T
                pl.BlockSpec((1, C_rd), lambda n: (0, 0)),        # reduce bias
                pl.BlockSpec((C_rd, C), lambda n: (0, 0)),        # expand W^T
                pl.BlockSpec((1, C), lambda n: (0, 0)),           # expand bias
            ],
            out_specs=pl.BlockSpec((TN, C, HW), lambda n: (n, 0, 0)),
        ),
        compiler_params=pltpu.CompilerParams(
            dimension_semantics=("parallel",),
            vmem_limit_bytes=int(vmem_limit),
        ),
        cost_estimate=cost,
    )(x_flat, w1t, b1, w2t, b2)


def _se_two_phase(x_flat, w1t, b1, w2t, b2, *, budget, vmem_limit, spatial_block):
    N, C, HW = x_flat.shape
    C_rd = w1t.shape[1]
    itemsize = x_flat.dtype.itemsize

    if spatial_block is None:
        # Largest lane-aligned spatial tile whose double-buffered in+out pair
        # (TN=1) fits the budget.
        spatial_block = max(128, (budget // (4 * C * itemsize)) // 128 * 128)
    else:
        spatial_block = max(128, int(spatial_block) // 128 * 128)
    ts = min(spatial_block, pl.cdiv(HW, 128) * 128)
    n_s = pl.cdiv(HW, ts)
    TN = _choose_batch_tile(N, C * ts * itemsize, budget)
    grid = (N // TN, n_s)
    # TODO(synk): extreme channel counts (C*128*itemsize*4 > budget) would
    # additionally need a channel-tiled pooling pass; not needed for SE shapes.

    # Phase 1: per-sample channel gate (pooled mean -> 2 GEMMs -> sigmoid).
    gate = pl.pallas_call(
        functools.partial(_se_gate_kernel, hw=HW, ts=ts, inv_hw=1.0 / HW),
        out_shape=jax.ShapeDtypeStruct((N, C, 1), jnp.float32),
        grid_spec=pltpu.PrefetchScalarGridSpec(
            num_scalar_prefetch=0,
            grid=grid,
            in_specs=[
                pl.BlockSpec((TN, C, ts), lambda n, s: (n, 0, s)),
                pl.BlockSpec((C, C_rd), lambda n, s: (0, 0)),
                pl.BlockSpec((1, C_rd), lambda n, s: (0, 0)),
                pl.BlockSpec((C_rd, C), lambda n, s: (0, 0)),
                pl.BlockSpec((1, C), lambda n, s: (0, 0)),
            ],
            out_specs=pl.BlockSpec((TN, C, 1), lambda n, s: (n, 0, 0)),
            scratch_shapes=[pltpu.VMEM((TN, C), jnp.float32)],
        ),
        compiler_params=pltpu.CompilerParams(
            dimension_semantics=("parallel", "arbitrary"),
            vmem_limit_bytes=int(vmem_limit),
        ),
    )(x_flat, w1t, b1, w2t, b2)

    # Phase 2: rescale x by the gate, tile by tile (both axes independent).
    return pl.pallas_call(
        _se_scale_kernel,
        out_shape=jax.ShapeDtypeStruct((N, C, HW), x_flat.dtype),
        grid_spec=pltpu.PrefetchScalarGridSpec(
            num_scalar_prefetch=0,
            grid=grid,
            in_specs=[
                pl.BlockSpec((TN, C, ts), lambda n, s: (n, 0, s)),
                pl.BlockSpec((TN, C, 1), lambda n, s: (n, 0, 0)),
            ],
            out_specs=pl.BlockSpec((TN, C, ts), lambda n, s: (n, 0, s)),
        ),
        compiler_params=pltpu.CompilerParams(
            dimension_semantics=("parallel", "parallel"),
            vmem_limit_bytes=int(vmem_limit),
        ),
    )(x_flat, gate)


def se_block(x_nchw, w_reduce, b_reduce, w_expand, b_expand, *,
             vmem_limit_bytes=None, spatial_block=None):
    """SEBlock forward.  x_nchw: (N, C, H, W); 1x1-conv weights as (C_rd, C)
    and (C, C_rd) plus biases.  Returns (N, C, H, W) in x's dtype."""
    N, C, H, W = x_nchw.shape
    C_rd = w_reduce.shape[0]
    HW = H * W

    if vmem_limit_bytes is None:
        vmem_limit_bytes = _default_vmem_limit_bytes()
    budget = vmem_limit_bytes * 3 // 4      # headroom for weights/scratch

    x_flat = x_nchw.reshape(N, C, HW)

    # Lane-friendly parameter layouts: contraction dim on the left of each
    # GEMM, biases as (1, C) rows; excitation math always in f32.
    w1t = jnp.asarray(w_reduce, jnp.float32).reshape(C_rd, C).T   # (C, C_rd)
    w2t = jnp.asarray(w_expand, jnp.float32).reshape(C, C_rd).T   # (C_rd, C)
    b1 = jnp.asarray(b_reduce, jnp.float32).reshape(1, C_rd)
    b2 = jnp.asarray(b_expand, jnp.float32).reshape(1, C)

    itemsize = x_flat.dtype.itemsize
    fused_fits = 4 * C * HW * itemsize <= budget   # TN=1, double-buffered in+out

    if spatial_block is None and fused_fits:
        out = _se_fused(x_flat, w1t, b1, w2t, b2,
                        budget=budget, vmem_limit=vmem_limit_bytes)
    else:
        out = _se_two_phase(x_flat, w1t, b1, w2t, b2,
                            budget=budget, vmem_limit=vmem_limit_bytes,
                            spatial_block=spatial_block)
    return out.reshape(N, C, H, W)


# ---------------------------------------------------------------------------
# Reference + self-test
# ---------------------------------------------------------------------------

def _reference(x, w1, b1, w2, b2):
    pooled = jnp.mean(x, axis=(2, 3))                        # (N, C)
    h = jnp.maximum(pooled @ w1.T + b1, 0.0)                 # (N, C_rd)
    g = jax.nn.sigmoid(h @ w2.T + b2)                        # (N, C)
    return x * g[:, :, None, None]


def _make_case(key, N, C, H, W, rd_ratio=0.0625):
    C_rd = max(1, int(C * rd_ratio))
    kx, k1, k2, k3, k4 = jax.random.split(key, 5)
    x = jax.random.normal(kx, (N, C, H, W), dtype=jnp.float32)
    w1 = jax.random.normal(k1, (C_rd, C), dtype=jnp.float32) * 0.1
    b1 = jax.random.normal(k2, (C_rd,), dtype=jnp.float32) * 0.1
    w2 = jax.random.normal(k3, (C, C_rd), dtype=jnp.float32) * 0.1
    b2 = jax.random.normal(k4, (C,), dtype=jnp.float32) * 0.1
    return x, w1, b1, w2, b2


if __name__ == "__main__":
    key = jax.random.PRNGKey(0)
    ka, kb, kc = jax.random.split(key, 3)

    # Case 1: SEBlock(in_channels=64, rd_ratio=0.0625) at 16x16 — fused path.
    x, w1, b1, w2, b2 = _make_case(ka, 8, 64, 16, 16)
    out = se_block(x, w1, b1, w2, b2)
    jax.block_until_ready(out)
    assert out.shape == x.shape
    assert jnp.allclose(out, _reference(x, w1, b1, w2, b2), atol=1e-5, rtol=1e-5)

    # Case 2: H*W = 49 (not a multiple of 128) — no wrapper pad/slice needed.
    x, w1, b1, w2, b2 = _make_case(kb, 4, 64, 7, 7)
    out = se_block(x, w1, b1, w2, b2)
    jax.block_until_ready(out)
    assert jnp.allclose(out, _reference(x, w1, b1, w2, b2), atol=1e-5, rtol=1e-5)

    # Case 3: force the spatially-tiled two-phase path (production-shape
    # fallback); H*W = 144 -> 2 spatial tiles of 128, last one partial.
    x, w1, b1, w2, b2 = _make_case(kc, 4, 64, 12, 12)
    out = se_block(x, w1, b1, w2, b2, spatial_block=128)
    jax.block_until_ready(out)
    assert jnp.allclose(out, _reference(x, w1, b1, w2, b2), atol=1e-5, rtol=1e-5)

    print("KERNEL_OK")
</pallas_src>

<mosaic_0001>
module attributes {stable_mosaic.version = 11 : i64} {
  func.func @_se_fused_kernel(%arg0: i32, %arg1: memref<8x64x256xf32, #tpu.memory_space<vmem>>, %arg2: memref<64x4xf32, #tpu.memory_space<vmem>>, %arg3: memref<1x4xf32, #tpu.memory_space<vmem>>, %arg4: memref<4x64xf32, #tpu.memory_space<vmem>>, %arg5: memref<1x64xf32, #tpu.memory_space<vmem>>, %arg6: memref<8x64x256xf32, #tpu.memory_space<vmem>>) attributes {dimension_semantics = [#tpu.dimension_semantics<parallel>], iteration_bounds = array<i64: 1>, scalar_prefetch = 0 : i64, scratch_operands = 0 : i64, tpu.core_type = #tpu.core_type<tc>, window_params = [{transform_indices = @transform_0, window_bounds = array<i64: 8, 64, 256>}, {pipeline_mode = #tpu.pipeline_mode<synchronous>, transform_indices = @transform_1, window_bounds = array<i64: 64, 4>}, {pipeline_mode = #tpu.pipeline_mode<synchronous>, transform_indices = @transform_2, window_bounds = array<i64: 1, 4>}, {pipeline_mode = #tpu.pipeline_mode<synchronous>, transform_indices = @transform_3, window_bounds = array<i64: 4, 64>}, {pipeline_mode = #tpu.pipeline_mode<synchronous>, transform_indices = @transform_4, window_bounds = array<i64: 1, 64>}, {transform_indices = @transform_5, window_bounds = array<i64: 8, 64, 256>}]} {
    %c0 = arith.constant 0 : index
    %c0_0 = arith.constant 0 : index
    %c0_1 = arith.constant 0 : index
    %0 = vector.load %arg1[%c0, %c0_0, %c0_1] : memref<8x64x256xf32, #tpu.memory_space<vmem>>, vector<8x64x256xf32>
    %cst = arith.constant dense<0.000000e+00> : vector<8x64xf32>
    %1 = vector.multi_reduction <add>, %0, %cst [2] : vector<8x64x256xf32> to vector<8x64xf32>
    %cst_2 = arith.constant 3.906250e-03 : f32
    %2 = vector.broadcast %cst_2 : f32 to vector<8x64xf32>
    %3 = arith.mulf %1, %2 : vector<8x64xf32>
    %c0_3 = arith.constant 0 : index
    %c0_4 = arith.constant 0 : index
    %4 = vector.load %arg2[%c0_3, %c0_4] : memref<64x4xf32, #tpu.memory_space<vmem>>, vector<64x4xf32>
    %cst_5 = arith.constant dense<0.000000e+00> : vector<8x4xf32>
    %5 = tpu.matmul %3, %4, %cst_5 {dimension_numbers = #tpu.dot_dimension_numbers<[1], [0], [0], [1], [0, 0, 1, 1], [], []>} : vector<8x64xf32>, vector<64x4xf32>, vector<8x4xf32> -> vector<8x4xf32>
    %c0_6 = arith.constant 0 : index
    %c0_7 = arith.constant 0 : index
    %6 = vector.load %arg3[%c0_6, %c0_7] : memref<1x4xf32, #tpu.memory_space<vmem>>, vector<1x4xf32>
    %7 = vector.broadcast %6 : vector<1x4xf32> to vector<8x4xf32>
    %8 = arith.addf %5, %7 : vector<8x4xf32>
    %cst_8 = arith.constant 0.000000e+00 : f32
    %9 = vector.broadcast %cst_8 : f32 to vector<8x4xf32>
    %10 = arith.maximumf %8, %9 : vector<8x4xf32>
    %c0_9 = arith.constant 0 : index
    %c0_10 = arith.constant 0 : index
    %11 = vector.load %arg4[%c0_9, %c0_10] : memref<4x64xf32, #tpu.memory_space<vmem>>, vector<4x64xf32>
    %cst_11 = arith.constant dense<0.000000e+00> : vector<8x64xf32>
    %12 = tpu.matmul %10, %11, %cst_11 {dimension_numbers = #tpu.dot_dimension_numbers<[1], [0], [0], [1], [0, 0, 1, 1], [], []>} : vector<8x4xf32>, vector<4x64xf32>, vector<8x64xf32> -> vector<8x64xf32>
    %c0_12 = arith.constant 0 : index
    %c0_13 = arith.constant 0 : index
    %13 = vector.load %arg5[%c0_12, %c0_13] : memref<1x64xf32, #tpu.memory_space<vmem>>, vector<1x64xf32>
    %14 = vector.broadcast %13 : vector<1x64xf32> to vector<8x64xf32>
    %15 = arith.addf %12, %14 : vector<8x64xf32>
    %16 = arith.negf %15 : vector<8x64xf32>
    %17 = math.exp %16 : vector<8x64xf32>
    %cst_14 = arith.constant 1.000000e+00 : f32
    %18 = vector.broadcast %cst_14 : f32 to vector<8x64xf32>
    %19 = arith.addf %18, %17 : vector<8x64xf32>
    %20 = arith.divf %18, %19 : vector<8x64xf32>
    %21 = vector.shape_cast %20 : vector<8x64xf32> to vector<8x64x1xf32>
    %22 = vector.broadcast %21 : vector<8x64x1xf32> to vector<8x64x256xf32>
    %23 = arith.mulf %0, %22 : vector<8x64x256xf32>
    %c0_15 = arith.constant 0 : index
    %c0_16 = arith.constant 0 : index
    %c0_17 = arith.constant 0 : index
    %24 = vector.load %arg6[%c0_15, %c0_16, %c0_17] : memref<8x64x256xf32, #tpu.memory_space<vmem>>, vector<8x64x256xf32>
    tpu.vector_store %arg6[%c0_15, %c0_16, %c0_17], %23 {strides = array<i32>} : memref<8x64x256xf32, #tpu.memory_space<vmem>>, vector<8x64x256xf32>,
    return
  }
  func.func @transform_0(%arg0: i32) -> (i32, i32, i32) {
    %c0_i32 = arith.constant 0 : i32
    %c0_i32_0 = arith.constant 0 : i32
    %c0_i32_1 = arith.constant 0 : i32
    return %arg0, %c0_i32, %c0_i32_0 : i32, i32, i32
  }
  func.func @transform_1(%arg0: i32) -> (i32, i32) {
    %c0_i32 = arith.constant 0 : i32
    %c0_i32_0 = arith.constant 0 : i32
    %c0_i32_1 = arith.constant 0 : i32
    return %c0_i32, %c0_i32_0 : i32, i32
  }
  func.func @transform_2(%arg0: i32) -> (i32, i32) {
    %c0_i32 = arith.constant 0 : i32
    %c0_i32_0 = arith.constant 0 : i32
    %c0_i32_1 = arith.constant 0 : i32
    return %c0_i32, %c0_i32_0 : i32, i32
  }
  func.func @transform_3(%arg0: i32) -> (i32, i32) {
    %c0_i32 = arith.constant 0 : i32
    %c0_i32_0 = arith.constant 0 : i32
    %c0_i32_1 = arith.constant 0 : i32
    return %c0_i32, %c0_i32_0 : i32, i32
  }
  func.func @transform_4(%arg0: i32) -> (i32, i32) {
    %c0_i32 = arith.constant 0 : i32
    %c0_i32_0 = arith.constant 0 : i32
    %c0_i32_1 = arith.constant 0 : i32
    return %c0_i32, %c0_i32_0 : i32, i32
  }
  func.func @transform_5(%arg0: i32) -> (i32, i32, i32) {
    %c0_i32 = arith.constant 0 : i32
    %c0_i32_0 = arith.constant 0 : i32
    %c0_i32_1 = arith.constant 0 : i32
    return %arg0, %c0_i32, %c0_i32_0 : i32, i32, i32
  }
}

</mosaic_0001>

<llo_original>
// kernel: tpu_custom_call.1
$region0: #{tpu_custom_call.1}
  #allocation0 [shape = 'u32[]', space=smem, size = 0x4, offset = 0x4, fixed_abs, tag = 'smem constant byte address 0x4 - core index']
  #allocation1 [shape = 'u32[144,128]{1,0:T(1,128)}', space=vmem, size = 0x12000, scoped, tag = 'internal scratch']
  %s0 = inlined_call_operand.hbm [shape: f32[8,64,256], index: 0, kind: input, shape index: {}]
  %s1 = inlined_call_operand.vmem [shape: f32[64,4], index: 1, kind: input, shape index: {}]
  %s2 = inlined_call_operand.vmem [shape: f32[1,4], index: 2, kind: input, shape index: {}]
  %s3 = inlined_call_operand.vmem [shape: f32[4,64], index: 3, kind: input, shape index: {}]
  %s4 = inlined_call_operand.vmem [shape: f32[1,64], index: 4, kind: input, shape index: {}]
  %s5 = inlined_call_operand.hbm [shape: f32[8,64,256], index: 5, kind: output, shape index: {}]
  %s6 = sld [smem:[#allocation0]]
  $region34: #{tpu_custom_call.1} parent=0
    _
  %s8 = ssub.s32 1, %s6
  %s9 = scalar_select 0, %s8, %s6
  $region1: #{tpu_custom_call.1} parent=0
    #allocation2 [shape = 'u8[524288]{0}', space=vmem, size = 0x80000, scoped, tag = 'input window, operand 0, single buffered']
    #allocation3 [shape = 's32[1]{0}', space=sflag, size = 0x4, scoped, tag = 'scoped memory for tpu_custom_call.1']
    #allocation4 [shape = 's32[1]{0}', space=sflag, size = 0x4, scoped, tag = 'scoped memory for tpu_custom_call.1']
    #allocation5 [shape = 'u8[524288]{0}', space=vmem, size = 0x80000, scoped, tag = 'output window, operand 0, single buffered']
    %10 = vsyncpa [#allocation3], 0
    %11 = vsyncpa [#allocation4], 0
    // Predicated region
    $region2: #{tpu_custom_call.1} parent=1 // pred_check
      _
    $region3: #{tpu_custom_call.1} parent=1 // pred_check_branch
      %13 = sbr.rel (0) target = $region5
    $region4: #{tpu_custom_call.1} parent=1 // pred_region
      %s15 = ssub.s32 16384, 16384
      %16 = vsyncadd [#allocation3], %s15
      %s17 = sshll.u32 [#allocation2], 4
      %s18 = int_to_ptr.vmem [resolvable:$true] %s17
      %23 = dma.hbm_to_vmem [thread:$0]  %s0, 16384, %s18, [#allocation3], 256, 256, 16
    $region5: #{tpu_custom_call.1} parent=1 // pred_fallthru
      _
    // Predicated region
    $region6: #{tpu_custom_call.1} parent=1 // pred_check
      _
    $region7: #{tpu_custom_call.1} parent=1 // pred_check_branch
      %25 = sbr.rel (0) target = $region9
    $region8: #{tpu_custom_call.1} parent=1 // pred_region
      _
    $region9: #{tpu_custom_call.1} parent=1 // pred_fallthru
      _
    // Predicated region
    $region10: #{tpu_custom_call.1} parent=1 // pred_check
      _
    $region11: #{tpu_custom_call.1} parent=1 // pred_check_branch
      %27 = sbr.rel (0) target = $region13
    $region12: #{tpu_custom_call.1} parent=1 // pred_region
      _
    $region13: #{tpu_custom_call.1} parent=1 // pred_fallthru
      _
    // Predicated region
    $region14: #{tpu_custom_call.1} parent=1 // pred_check
      _
    $region15: #{tpu_custom_call.1} parent=1 // pred_check_branch
      %29 = sbr.rel (0) target = $region17
    $region16: #{tpu_custom_call.1} parent=1 // pred_region
      _
    $region17: #{tpu_custom_call.1} parent=1 // pred_fallthru
      _
    // Predicated region
    $region18: #{tpu_custom_call.1} parent=1 // pred_check
      _
    $region19: #{tpu_custom_call.1} parent=1 // pred_check_branch
      %31 = sbr.rel (0) target = $region21
    $region20: #{tpu_custom_call.1} parent=1 // pred_region
      _
    $region21: #{tpu_custom_call.1} parent=1 // pred_fallthru
      _
    // Predicated region
    $region22: #{tpu_custom_call.1} parent=1 // pred_check
      _
    $region23: #{tpu_custom_call.1} parent=1 // pred_check_branch
      %33 = sbr.rel (0) target = $region25
    $region24: #{tpu_custom_call.1} parent=1 // pred_region
      %34 = dma.done [#allocation3], 16384
    $region25: #{tpu_custom_call.1} parent=1 // pred_fallthru
      _
    %v35 = vld [vmem:[#allocation2] sm:$0xff]
    %v36 = vld [vmem:[#allocation2 + $0x8] sm:$0xff]
    %v37 = vld [vmem:[#allocation2 + $0x10] sm:$0xff]
    %v38 = vld [vmem:[#allocation2 + $0x18] sm:$0xff]
    %v39 = vld [vmem:[#allocation2 + $0x20] sm:$0xff]
    %v40 = vld [vmem:[#allocation2 + $0x28] sm:$0xff]
    %v41 = vld [vmem:[#allocation2 + $0x30] sm:$0xff]
    %v42 = vld [vmem:[#allocation2 + $0x38] sm:$0xff]
    %v43 = vld [vmem:[#allocation2 + $0x40] sm:$0xff]
    %v44 = vld [vmem:[#allocation2 + $0x48] sm:$0xff]
    %v45 = vld [vmem:[#allocation2 + $0x50] sm:$0xff]
    %v46 = vld [vmem:[#allocation2 + $0x58] sm:$0xff]
    %v47 = vld [vmem:[#allocation2 + $0x60] sm:$0xff]
    %v48 = vld [vmem:[#allocation2 + $0x68] sm:$0xff]
    %v49 = vld [vmem:[#allocation2 + $0x70] sm:$0xff]
    %v50 = vld [vmem:[#allocation2 + $0x78] sm:$0xff]
    %v51 = vld [vmem:[#allocation2 + $0x80] sm:$0xff]
    %v52 = vld [vmem:[#allocation2 + $0x88] sm:$0xff]
    %v53 = vld [vmem:[#allocation2 + $0x90] sm:$0xff]
    %v54 = vld [vmem:[#allocation2 + $0x98] sm:$0xff]
    %v55 = vld [vmem:[#allocation2 + $0xa0] sm:$0xff]
    %v56 = vld [vmem:[#allocation2 + $0xa8] sm:$0xff]
    %v57 = vld [vmem:[#allocation2 + $0xb0] sm:$0xff]
    %v58 = vld [vmem:[#allocation2 + $0xb8] sm:$0xff]
    %v59 = vld [vmem:[#allocation2 + $0xc0] sm:$0xff]
    %v60 = vld [vmem:[#allocation2 + $0xc8] sm:$0xff]
    %v61 = vld [vmem:[#allocation2 + $0xd0] sm:$0xff]
    %v62 = vld [vmem:[#allocation2 + $0xd8] sm:$0xff]
    %v63 = vld [vmem:[#allocation2 + $0xe0] sm:$0xff]
    %v64 = vld [vmem:[#allocation2 + $0xe8] sm:$0xff]
    %v65 = vld [vmem:[#allocation2 + $0xf0] sm:$0xff]
    %v66 = vld [vmem:[#allocation2 + $0xf8] sm:$0xff]
    %v67 = vld [vmem:[#allocation2 + $0x100] sm:$0xff]
    %v68 = vld [vmem:[#allocation2 + $0x108] sm:$0xff]
    %v69 = vld [vmem:[#allocation2 + $0x110] sm:$0xff]
    %v70 = vld [vmem:[#allocation2 + $0x118] sm:$0xff]
    %v71 = vld [vmem:[#allocation2 + $0x120] sm:$0xff]
    %v72 = vld [vmem:[#allocation2 + $0x128] sm:$0xff]
    %v73 = vld [vmem:[#allocation2 + $0x130] sm:$0xff]
    %v74 = vld [vmem:[#allocation2 + $0x138] sm:$0xff]
    %v75 = vld [vmem:[#allocation2 + $0x140] sm:$0xff]
    %v76 = vld [vmem:[#allocation2 + $0x148] sm:$0xff]
    %v77 = vld [vmem:[#allocation2 + $0x150] sm:$0xff]
    %v78 = vld [vmem:[#allocation2 + $0x158] sm:$0xff]
    %v79 = vld [vmem:[#allocation2 + $0x160] sm:$0xff]
    %v80 = vld [vmem:[#allocation2 + $0x168] sm:$0xff]
    %v81 = vld [vmem:[#allocation2 + $0x170] sm:$0xff]
    %v82 = vld [vmem:[#allocation2 + $0x178] sm:$0xff]
    %v83 = vld [vmem:[#allocation2 + $0x180] sm:$0xff]
    %v84 = vld [vmem:[#allocation2 + $0x188] sm:$0xff]
    %v85 = vld [vmem:[#allocation2 + $0x190] sm:$0xff]
    %v86 = vld [vmem:[#allocation2 + $0x198] sm:$0xff]
    %v87 = vld [vmem:[#allocation2 + $0x1a0] sm:$0xff]
    %v88 = vld [vmem:[#allocation2 + $0x1a8] sm:$0xff]
    %v89 = vld [vmem:[#allocation2 + $0x1b0] sm:$0xff]
    %v90 = vld [vmem:[#allocation2 + $0x1b8] sm:$0xff]
    %v91 = vld [vmem:[#allocation2 + $0x1c0] sm:$0xff]
    %v92 = vld [vmem:[#allocation2 + $0x1c8] sm:$0xff]
    %v93 = vld [vmem:[#allocation2 + $0x1d0] sm:$0xff]
    %v94 = vld [vmem:[#allocation2 + $0x1d8] sm:$0xff]
    %v95 = vld [vmem:[#allocation2 + $0x1e0] sm:$0xff]
    %v96 = vld [vmem:[#allocation2 + $0x1e8] sm:$0xff]
    %v97 = vld [vmem:[#allocation2 + $0x1f0] sm:$0xff]
    %v98 = vld [vmem:[#allocation2 + $0x1f8] sm:$0xff]
    %v99 = vld [vmem:[#allocation2 + $0x200] sm:$0xff]
    %v100 = vld [vmem:[#allocation2 + $0x208] sm:$0xff]
    %v101 = vld [vmem:[#allocation2 + $0x210] sm:$0xff]
    %v102 = vld [vmem:[#allocation2 + $0x218] sm:$0xff]
    %v103 = vld [vmem:[#allocation2 + $0x220] sm:$0xff]
    %v104 = vld [vmem:[#allocation2 + $0x228] sm:$0xff]
    %v105 = vld [vmem:[#allocation2 + $0x230] sm:$0xff]
    %v106 = vld [vmem:[#allocation2 + $0x238] sm:$0xff]
    %v107 = vld [vmem:[#allocation2 + $0x240] sm:$0xff]
    %v108 = vld [vmem:[#allocation2 + $0x248] sm:$0xff]
    %v109 = vld [vmem:[#allocation2 + $0x250] sm:$0xff]
    %v110 = vld [vmem:[#allocation2 + $0x258] sm:$0xff]
    %v111 = vld [vmem:[#allocation2 + $0x260] sm:$0xff]
    %v112 = vld [vmem:[#allocation2 + $0x268] sm:$0xff]
    %v113 = vld [vmem:[#allocation2 + $0x270] sm:$0xff]
    %v114 = vld [vmem:[#allocation2 + $0x278] sm:$0xff]
    %v115 = vld [vmem:[#allocation2 + $0x280] sm:$0xff]
    %v116 = vld [vmem:[#allocation2 + $0x288] sm:$0xff]
    %v117 = vld [vmem:[#allocation2 + $0x290] sm:$0xff]
    %v118 = vld [vmem:[#allocation2 + $0x298] sm:$0xff]
    %v119 = vld [vmem:[#allocation2 + $0x2a0] sm:$0xff]
    %v120 = vld [vmem:[#allocation2 + $0x2a8] sm:$0xff]
    %v121 = vld [vmem:[#allocation2 + $0x2b0] sm:$0xff]
    %v122 = vld [vmem:[#allocation2 + $0x2b8] sm:$0xff]
    %v123 = vld [vmem:[#allocation2 + $0x2c0] sm:$0xff]
    %v124 = vld [vmem:[#allocation2 + $0x2c8] sm:$0xff]
    %v125 = vld [vmem:[#allocation2 + $0x2d0] sm:$0xff]
    %v126 = vld [vmem:[#allocation2 + $0x2d8] sm:$0xff]
    %v127 = vld [vmem:[#allocation2 + $0x2e0] sm:$0xff]
    %v128 = vld [vmem:[#allocation2 + $0x2e8] sm:$0xff]
    %v129 = vld [vmem:[#allocation2 + $0x2f0] sm:$0xff]
    %v130 = vld [vmem:[#allocation2 + $0x2f8] sm:$0xff]
    %v131 = vld [vmem:[#allocation2 + $0x300] sm:$0xff]
    %v132 = vld [vmem:[#allocation2 + $0x308] sm:$0xff]
    %v133 = vld [vmem:[#allocation2 + $0x310] sm:$0xff]
    %v134 = vld [vmem:[#allocation2 + $0x318] sm:$0xff]
    %v135 = vld [vmem:[#allocation2 + $0x320] sm:$0xff]
    %v136 = vld [vmem:[#allocation2 + $0x328] sm:$0xff]
    %v137 = vld [vmem:[#allocation2 + $0x330] sm:$0xff]
    %v138 = vld [vmem:[#allocation2 + $0x338] sm:$0xff]
    %v139 = vld [vmem:[#allocation2 + $0x340] sm:$0xff]
    %v140 = vld [vmem:[#allocation2 + $0x348] sm:$0xff]
    %v141 = vld [vmem:[#allocation2 + $0x350] sm:$0xff]
    %v142 = vld [vmem:[#allocation2 + $0x358] sm:$0xff]
    %v143 = vld [vmem:[#allocation2 + $0x360] sm:$0xff]
    %v144 = vld [vmem:[#allocation2 + $0x368] sm:$0xff]
    %v145 = vld [vmem:[#allocation2 + $0x370] sm:$0xff]
    %v146 = vld [vmem:[#allocation2 + $0x378] sm:$0xff]
    %v147 = vld [vmem:[#allocation2 + $0x380] sm:$0xff]
    %v148 = vld [vmem:[#allocation2 + $0x388] sm:$0xff]
    %v149 = vld [vmem:[#allocation2 + $0x390] sm:$0xff]
    %v150 = vld [vmem:[#allocation2 + $0x398] sm:$0xff]
    %v151 = vld [vmem:[#allocation2 + $0x3a0] sm:$0xff]
    %v152 = vld [vmem:[#allocation2 + $0x3a8] sm:$0xff]
    %v153 = vld [vmem:[#allocation2 + $0x3b0] sm:$0xff]
    %v154 = vld [vmem:[#allocation2 + $0x3b8] sm:$0xff]
    %v155 = vld [vmem:[#allocation2 + $0x3c0] sm:$0xff]
    %v156 = vld [vmem:[#allocation2 + $0x3c8] sm:$0xff]
    %v157 = vld [vmem:[#allocation2 + $0x3d0] sm:$0xff]
    %v158 = vld [vmem:[#allocation2 + $0x3d8] sm:$0xff]
    %v159 = vld [vmem:[#allocation2 + $0x3e0] sm:$0xff]
    %v160 = vld [vmem:[#allocation2 + $0x3e8] sm:$0xff]
    %v161 = vld [vmem:[#allocation2 + $0x3f0] sm:$0xff]
    %v162 = vld [vmem:[#allocation2 + $0x3f8] sm:$0xff]
    %v163 = vadd.f32 %v35, %v36
    %164 = vadd.xlane.f32.xlu0 %v163
    %v165 = vpop.xlane.xlu0 %164
    %v166 = vadd.f32 %v37, %v38
    %167 = vadd.xlane.f32.xlu0 %v166
    %v168 = vpop.xlane.xlu0 %167
    %v169 = vadd.f32 %v39, %v40
    %170 = vadd.xlane.f32.xlu0 %v169
    %v171 = vpop.xlane.xlu0 %170
    %v172 = vadd.f32 %v41, %v42
    %173 = vadd.xlane.f32.xlu0 %v172
    %v174 = vpop.xlane.xlu0 %173
    %v175 = vadd.f32 %v43, %v44
    %176 = vadd.xlane.f32.xlu0 %v175
    %v177 = vpop.xlane.xlu0 %176
    %v178 = vadd.f32 %v45, %v46
    %179 = vadd.xlane.f32.xlu0 %v178
    %v180 = vpop.xlane.xlu0 %179
    %v181 = vadd.f32 %v47, %v48
    %182 = vadd.xlane.f32.xlu0 %v181
    %v183 = vpop.xlane.xlu0 %182
    %v184 = vadd.f32 %v49, %v50
    %185 = vadd.xlane.f32.xlu0 %v184
    %v186 = vpop.xlane.xlu0 %185
    %v187 = vadd.f32 %v51, %v52
    %188 = vadd.xlane.f32.xlu0 %v187
    %v189 = vpop.xlane.xlu0 %188
    %v190 = vadd.f32 %v53, %v54
    %191 = vadd.xlane.f32.xlu0 %v190
    %v192 = vpop.xlane.xlu0 %191
    %v193 = vadd.f32 %v55, %v56
    %194 = vadd.xlane.f32.xlu0 %v193
    %v195 = vpop.xlane.xlu0 %194
    %v196 = vadd.f32 %v57, %v58
    %197 = vadd.xlane.f32.xlu0 %v196
    %v198 = vpop.xlane.xlu0 %197
    %v199 = vadd.f32 %v59, %v60
    %200 = vadd.xlane.f32.xlu0 %v199
    %v201 = vpop.xlane.xlu0 %200
    %v202 = vadd.f32 %v61, %v62
    %203 = vadd.xlane.f32.xlu0 %v202
    %v204 = vpop.xlane.xlu0 %203
    %v205 = vadd.f32 %v63, %v64
    %206 = vadd.xlane.f32.xlu0 %v205
    %v207 = vpop.xlane.xlu0 %206
    %v208 = vadd.f32 %v65, %v66
    %209 = vadd.xlane.f32.xlu0 %v208
    %v210 = vpop.xlane.xlu0 %209
    %v211 = vadd.f32 %v67, %v68
    %212 = vadd.xlane.f32.xlu0 %v211
    %v213 = vpop.xlane.xlu0 %212
    %v214 = vadd.f32 %v69, %v70
    %215 = vadd.xlane.f32.xlu0 %v214
    %v216 = vpop.xlane.xlu0 %215
    %v217 = vadd.f32 %v71, %v72
    %218 = vadd.xlane.f32.xlu0 %v217
    %v219 = vpop.xlane.xlu0 %218
    %v220 = vadd.f32 %v73, %v74
    %221 = vadd.xlane.f32.xlu0 %v220
    %v222 = vpop.xlane.xlu0 %221
    %v223 = vadd.f32 %v75, %v76
    %224 = vadd.xlane.f32.xlu0 %v223
    %v225 = vpop.xlane.xlu0 %224
    %v226 = vadd.f32 %v77, %v78
    %227 = vadd.xlane.f32.xlu0 %v226
    %v228 = vpop.xlane.xlu0 %227
    %v229 = vadd.f32 %v79, %v80
    %230 = vadd.xlane.f32.xlu0 %v229
    %v231 = vpop.xlane.xlu0 %230
    %v232 = vadd.f32 %v81, %v82
    %233 = vadd.xlane.f32.xlu0 %v232
    %v234 = vpop.xlane.xlu0 %233
    %v235 = vadd.f32 %v83, %v84
    %236 = vadd.xlane.f32.xlu0 %v235
    %v237 = vpop.xlane.xlu0 %236
    %v238 = vadd.f32 %v85, %v86
    %239 = vadd.xlane.f32.xlu0 %v238
    %v240 = vpop.xlane.xlu0 %239
    %v241 = vadd.f32 %v87, %v88
    %242 = vadd.xlane.f32.xlu0 %v241
    %v243 = vpop.xlane.xlu0 %242
    %v244 = vadd.f32 %v89, %v90
    %245 = vadd.xlane.f32.xlu0 %v244
    %v246 = vpop.xlane.xlu0 %245
    %v247 = vadd.f32 %v91, %v92
    %248 = vadd.xlane.f32.xlu0 %v247
    %v249 = vpop.xlane.xlu0 %248
    %v250 = vadd.f32 %v93, %v94
    %251 = vadd.xlane.f32.xlu0 %v250
    %v252 = vpop.xlane.xlu0 %251
    %v253 = vadd.f32 %v95, %v96
    %254 = vadd.xlane.f32.xlu0 %v253
    %v255 = vpop.xlane.xlu0 %254
    %v256 = vadd.f32 %v97, %v98
    %257 = vadd.xlane.f32.xlu0 %v256
    %v258 = vpop.xlane.xlu0 %257
    %v259 = vadd.f32 %v99, %v100
    %260 = vadd.xlane.f32.xlu0 %v259
    %v261 = vpop.xlane.xlu0 %260
    %v262 = vadd.f32 %v101, %v102
    %263 = vadd.xlane.f32.xlu0 %v262
    %v264 = vpop.xlane.xlu0 %263
    %v265 = vadd.f32 %v103, %v104
    %266 = vadd.xlane.f32.xlu0 %v265
    %v267 = vpop.xlane.xlu0 %266
    %v268 = vadd.f32 %v105, %v106
    %269 = vadd.xlane.f32.xlu0 %v268
    %v270 = vpop.xlane.xlu0 %269
    %v271 = vadd.f32 %v107, %v108
    %272 = vadd.xlane.f32.xlu0 %v271
    %v273 = vpop.xlane.xlu0 %272
    %v274 = vadd.f32 %v109, %v110
    %275 = vadd.xlane.f32.xlu0 %v274
    %v276 = vpop.xlane.xlu0 %275
    %v277 = vadd.f32 %v111, %v112
    %278 = vadd.xlane.f32.xlu0 %v277
    %v279 = vpop.xlane.xlu0 %278
    %v280 = vadd.f32 %v113, %v114
    %281 = vadd.xlane.f32.xlu0 %v280
    %v282 = vpop.xlane.xlu0 %281
    %v283 = vadd.f32 %v115, %v116
    %284 = vadd.xlane.f32.xlu0 %v283
    %v285 = vpop.xlane.xlu0 %284
    %v286 = vadd.f32 %v117, %v118
    %287 = vadd.xlane.f32.xlu0 %v286
    %v288 = vpop.xlane.xlu0 %287
    %v289 = vadd.f32 %v119, %v120
    %290 = vadd.xlane.f32.xlu0 %v289
    %v291 = vpop.xlane.xlu0 %290
    %v292 = vadd.f32 %v121, %v122
    %293 = vadd.xlane.f32.xlu0 %v292
    %v294 = vpop.xlane.xlu0 %293
    %v295 = vadd.f32 %v123, %v124
    %296 = vadd.xlane.f32.xlu0 %v295
    %v297 = vpop.xlane.xlu0 %296
    %v298 = vadd.f32 %v125, %v126
    %299 = vadd.xlane.f32.xlu0 %v298
    %v300 = vpop.xlane.xlu0 %299
    %v301 = vadd.f32 %v127, %v128
    %302 = vadd.xlane.f32.xlu0 %v301
    %v303 = vpop.xlane.xlu0 %302
    %v304 = vadd.f32 %v129, %v130
    %305 = vadd.xlane.f32.xlu0 %v304
    %v306 = vpop.xlane.xlu0 %305
    %v307 = vadd.f32 %v131, %v132
    %308 = vadd.xlane.f32.xlu0 %v307
    %v309 = vpop.xlane.xlu0 %308
    %v310 = vadd.f32 %v133, %v134
    %311 = vadd.xlane.f32.xlu0 %v310
    %v312 = vpop.xlane.xlu0 %311
    %v313 = vadd.f32 %v135, %v136
    %314 = vadd.xlane.f32.xlu0 %v313
    %v315 = vpop.xlane.xlu0 %314
    %v316 = vadd.f32 %v137, %v138
    %317 = vadd.xlane.f32.xlu0 %v316
    %v318 = vpop.xlane.xlu0 %317
    %v319 = vadd.f32 %v139, %v140
    %320 = vadd.xlane.f32.xlu0 %v319
    %v321 = vpop.xlane.xlu0 %320
    %v322 = vadd.f32 %v141, %v142
    %323 = vadd.xlane.f32.xlu0 %v322
    %v324 = vpop.xlane.xlu0 %323
    %v325 = vadd.f32 %v143, %v144
    %326 = vadd.xlane.f32.xlu0 %v325
    %v327 = vpop.xlane.xlu0 %326
    %v328 = vadd.f32 %v145, %v146
    %329 = vadd.xlane.f32.xlu0 %v328
    %v330 = vpop.xlane.xlu0 %329
    %v331 = vadd.f32 %v147, %v148
    %332 = vadd.xlane.f32.xlu0 %v331
    %v333 = vpop.xlane.xlu0 %332
    %v334 = vadd.f32 %v149, %v150
    %335 = vadd.xlane.f32.xlu0 %v334
    %v336 = vpop.xlane.xlu0 %335
    %v337 = vadd.f32 %v151, %v152
    %338 = vadd.xlane.f32.xlu0 %v337
    %v339 = vpop.xlane.xlu0 %338
    %v340 = vadd.f32 %v153, %v154
    %341 = vadd.xlane.f32.xlu0 %v340
    %v342 = vpop.xlane.xlu0 %341
    %v343 = vadd.f32 %v155, %v156
    %344 = vadd.xlane.f32.xlu0 %v343
    %v345 = vpop.xlane.xlu0 %344
    %v346 = vadd.f32 %v157, %v158
    %347 = vadd.xlane.f32.xlu0 %v346
    %v348 = vpop.xlane.xlu0 %347
    %v349 = vadd.f32 %v159, %v160
    %350 = vadd.xlane.f32.xlu0 %v349
    %v351 = vpop.xlane.xlu0 %350
    %v352 = vadd.f32 %v161, %v162
    %353 = vadd.xlane.f32.xlu0 %v352
    %v354 = vpop.xlane.xlu0 %353
    %v355 = vmul.f32 %v165, 0.00390625
    %v356 = vmul.f32 %v168, 0.00390625
    %v357 = vmul.f32 %v171, 0.00390625
    %v358 = vmul.f32 %v174, 0.00390625
    %v359 = vmul.f32 %v177, 0.00390625
    %v360 = vmul.f32 %v180, 0.00390625
    %v361 = vmul.f32 %v183, 0.00390625
    %v362 = vmul.f32 %v186, 0.00390625
    %v363 = vmul.f32 %v189, 0.00390625
    %v364 = vmul.f32 %v192, 0.00390625
    %v365 = vmul.f32 %v195, 0.00390625
    %v366 = vmul.f32 %v198, 0.00390625
    %v367 = vmul.f32 %v201, 0.00390625
    %v368 = vmul.f32 %v204, 0.00390625
    %v369 = vmul.f32 %v207, 0.00390625
    %v370 = vmul.f32 %v210, 0.00390625
    %v371 = vmul.f32 %v213, 0.00390625
    %v372 = vmul.f32 %v216, 0.00390625
    %v373 = vmul.f32 %v219, 0.00390625
    %v374 = vmul.f32 %v222, 0.00390625
    %v375 = vmul.f32 %v225, 0.00390625
    %v376 = vmul.f32 %v228, 0.00390625
    %v377 = vmul.f32 %v231, 0.00390625
    %v378 = vmul.f32 %v234, 0.00390625
    %v379 = vmul.f32 %v237, 0.00390625
    %v380 = vmul.f32 %v240, 0.00390625
    %v381 = vmul.f32 %v243, 0.00390625
    %v382 = vmul.f32 %v246, 0.00390625
    %v383 = vmul.f32 %v249, 0.00390625
    %v384 = vmul.f32 %v252, 0.00390625
    %v385 = vmul.f32 %v255, 0.00390625
    %v386 = vmul.f32 %v258, 0.00390625
    %v387 = vmul.f32 %v261, 0.00390625
    %v388 = vmul.f32 %v264, 0.00390625
    %v389 = vmul.f32 %v267, 0.00390625
    %v390 = vmul.f32 %v270, 0.00390625
    %v391 = vmul.f32 %v273, 0.00390625
    %v392 = vmul.f32 %v276, 0.00390625
    %v393 = vmul.f32 %v279, 0.00390625
    %v394 = vmul.f32 %v282, 0.00390625
    %v395 = vmul.f32 %v285, 0.00390625
    %v396 = vmul.f32 %v288, 0.00390625
    %v397 = vmul.f32 %v291, 0.00390625
    %v398 = vmul.f32 %v294, 0.00390625
    %v399 = vmul.f32 %v297, 0.00390625
    %v400 = vmul.f32 %v300, 0.00390625
    %v401 = vmul.f32 %v303, 0.00390625
    %v402 = vmul.f32 %v306, 0.00390625
    %v403 = vmul.f32 %v309, 0.00390625
    %v404 = vmul.f32 %v312, 0.00390625
    %v405 = vmul.f32 %v315, 0.00390625
    %v406 = vmul.f32 %v318, 0.00390625
    %v407 = vmul.f32 %v321, 0.00390625
    %v408 = vmul.f32 %v324, 0.00390625
    %v409 = vmul.f32 %v327, 0.00390625
    %v410 = vmul.f32 %v330, 0.00390625
    %v411 = vmul.f32 %v333, 0.00390625
    %v412 = vmul.f32 %v336, 0.00390625
    %v413 = vmul.f32 %v339, 0.00390625
    %v414 = vmul.f32 %v342, 0.00390625
    %v415 = vmul.f32 %v345, 0.00390625
    %v416 = vmul.f32 %v348, 0.00390625
    %v417 = vmul.f32 %v351, 0.00390625
    %v418 = vmul.f32 %v354, 0.00390625
    %v419 = vld [vmem:[%s1] sm:$0xff]
    %v420 = vld [vmem:[%s1 + $0x8] sm:$0xff]
    %v421 = vld [vmem:[%s1 + $0x10] sm:$0xff]
    %v422 = vld [vmem:[%s1 + $0x18] sm:$0xff]
    %v423 = vld [vmem:[%s1 + $0x20] sm:$0xff]
    %v424 = vld [vmem:[%s1 + $0x28] sm:$0xff]
    %v425 = vld [vmem:[%s1 + $0x30] sm:$0xff]
    %v426 = vld [vmem:[%s1 + $0x38] sm:$0xff]
    %v427 = vld [vmem:[%s2] sm:$0x1]
    %v429 = vlaneseq
    %v430 = vshrl.u32 %v429, 7
    %v431 = vsub.s32 0, %v430
    %v432 = vrot.slane %v427, %v431
    %v498 = vlaneseq
    %v499 = vand.u32 %v498, 127
    %v500 = vlaneseq
    %v501 = vshrl.u32 %v500, 7
    %v502 = vsub.s32 %v499, %v501
    %v503 = vrot.slane %v355, %v502
    %v504 = vadd.s32 %v499, 4294967288
    %v505 = vlaneseq
    %v506 = vshrl.u32 %v505, 7
    %v507 = vsub.s32 %v504, %v506
    %v508 = vrot.slane %v356, %v507
    %vm509 = vcmask 130112
    %v510 = vsel %vm509, %v508, %v503
    %v511 = vadd.s32 %v499, 4294967280
    %v512 = vlaneseq
    %v513 = vshrl.u32 %v512, 7
    %v514 = vsub.s32 %v511, %v513
    %v515 = vrot.slane %v357, %v514
    %vm516 = vcmask 195712
    %v517 = vsel %vm516, %v515, %v510
    %v518 = vadd.s32 %v499, 4294967272
    %v519 = vlaneseq
    %v520 = vshrl.u32 %v519, 7
    %v521 = vsub.s32 %v518, %v520
    %v522 = vrot.slane %v358, %v521
    %vm523 = vcmask 261312
    %v524 = vsel %vm523, %v522, %v517
    %v525 = vadd.s32 %v499, 4294967264
    %v526 = vlaneseq
    %v527 = vshrl.u32 %v526, 7
    %v528 = vsub.s32 %v525, %v527
    %v529 = vrot.slane %v359, %v528
    %vm530 = vcmask 326912
    %v531 = vsel %vm530, %v529, %v524
    %v532 = vadd.s32 %v499, 4294967256
    %v533 = vlaneseq
    %v534 = vshrl.u32 %v533, 7
    %v535 = vsub.s32 %v532, %v534
    %v536 = vrot.slane %v360, %v535
    %vm537 = vcmask 392512
    %v538 = vsel %vm537, %v536, %v531
    %v539 = vadd.s32 %v499, 4294967248
    %v540 = vlaneseq
    %v541 = vshrl.u32 %v540, 7
    %v542 = vsub.s32 %v539, %v541
    %v543 = vrot.slane %v361, %v542
    %vm544 = vcmask 458112
    %v545 = vsel %vm544, %v543, %v538
    %v546 = vadd.s32 %v499, 4294967240
    %v547 = vlaneseq
    %v548 = vshrl.u32 %v547, 7
    %v549 = vsub.s32 %v546, %v548
    %v550 = vrot.slane %v362, %v549
    %vm551 = vcmask 523712
    %v552 = vsel %vm551, %v550, %v545
    %v553 = vlaneseq
    %v554 = vshrl.u32 %v553, 7
    %v555 = vsub.s32 %v499, %v554
    %v556 = vrot.slane %v363, %v555
    %v557 = vlaneseq
    %v558 = vshrl.u32 %v557, 7
    %v559 = vsub.s32 %v504, %v558
    %v560 = vrot.slane %v364, %v559
    %v561 = vsel %vm509, %v560, %v556
    %v562 = vlaneseq
    %v563 = vshrl.u32 %v562, 7
    %v564 = vsub.s32 %v511, %v563
    %v565 = vrot.slane %v365, %v564
    %v566 = vsel %vm516, %v565, %v561
    %v567 = vlaneseq
    %v568 = vshrl.u32 %v567, 7
    %v569 = vsub.s32 %v518, %v568
    %v570 = vrot.slane %v366, %v569
    %v571 = vsel %vm523, %v570, %v566
    %v572 = vlaneseq
    %v573 = vshrl.u32 %v572, 7
    %v574 = vsub.s32 %v525, %v573
    %v575 = vrot.slane %v367, %v574
    %v576 = vsel %vm530, %v575, %v571
    %v577 = vlaneseq
    %v578 = vshrl.u32 %v577, 7
    %v579 = vsub.s32 %v532, %v578
    %v580 = vrot.slane %v368, %v579
    %v581 = vsel %vm537, %v580, %v576
    %v582 = vlaneseq
    %v583 = vshrl.u32 %v582, 7
    %v584 = vsub.s32 %v539, %v583
    %v585 = vrot.slane %v369, %v584
    %v586 = vsel %vm544, %v585, %v581
    %v587 = vlaneseq
    %v588 = vshrl.u32 %v587, 7
    %v589 = vsub.s32 %v546, %v588
    %v590 = vrot.slane %v370, %v589
    %v591 = vsel %vm551, %v590, %v586
    %v592 = vlaneseq
    %v593 = vshrl.u32 %v592, 7
    %v594 = vsub.s32 %v499, %v593
    %v595 = vrot.slane %v371, %v594
    %v596 = vlaneseq
    %v597 = vshrl.u32 %v596, 7
    %v598 = vsub.s32 %v504, %v597
    %v599 = vrot.slane %v372, %v598
    %v600 = vsel %vm509, %v599, %v595
    %v601 = vlaneseq
    %v602 = vshrl.u32 %v601, 7
    %v603 = vsub.s32 %v511, %v602
    %v604 = vrot.slane %v373, %v603
    %v605 = vsel %vm516, %v604, %v600
    %v606 = vlaneseq
    %v607 = vshrl.u32 %v606, 7
    %v608 = vsub.s32 %v518, %v607
    %v609 = vrot.slane %v374, %v608
    %v610 = vsel %vm523, %v609, %v605
    %v611 = vlaneseq
    %v612 = vshrl.u32 %v611, 7
    %v613 = vsub.s32 %v525, %v612
    %v614 = vrot.slane %v375, %v613
    %v615 = vsel %vm530, %v614, %v610
    %v616 = vlaneseq
    %v617 = vshrl.u32 %v616, 7
    %v618 = vsub.s32 %v532, %v617
    %v619 = vrot.slane %v376, %v618
    %v620 = vsel %vm537, %v619, %v615
    %v621 = vlaneseq
    %v622 = vshrl.u32 %v621, 7
    %v623 = vsub.s32 %v539, %v622
    %v624 = vrot.slane %v377, %v623
    %v625 = vsel %vm544, %v624, %v620
    %v626 = vlaneseq
    %v627 = vshrl.u32 %v626, 7
    %v628 = vsub.s32 %v546, %v627
    %v629 = vrot.slane %v378, %v628
    %v630 = vsel %vm551, %v629, %v625
    %v631 = vlaneseq
    %v632 = vshrl.u32 %v631, 7
    %v633 = vsub.s32 %v499, %v632
    %v634 = vrot.slane %v379, %v633
    %v635 = vlaneseq
    %v636 = vshrl.u32 %v635, 7
    %v637 = vsub.s32 %v504, %v636
    %v638 = vrot.slane %v380, %v637
    %v639 = vsel %vm509, %v638, %v634
    %v640 = vlaneseq
    %v641 = vshrl.u32 %v640, 7
    %v642 = vsub.s32 %v511, %v641
    %v643 = vrot.slane %v381, %v642
    %v644 = vsel %vm516, %v643, %v639
    %v645 = vlaneseq
    %v646 = vshrl.u32 %v645, 7
    %v647 = vsub.s32 %v518, %v646
    %v648 = vrot.slane %v382, %v647
    %v649 = vsel %vm523, %v648, %v644
    %v650 = vlaneseq
    %v651 = vshrl.u32 %v650, 7
    %v652 = vsub.s32 %v525, %v651
    %v653 = vrot.slane %v383, %v652
    %v654 = vsel %vm530, %v653, %v649
    %v655 = vlaneseq
    %v656 = vshrl.u32 %v655, 7
    %v657 = vsub.s32 %v532, %v656
    %v658 = vrot.slane %v384, %v657
    %v659 = vsel %vm537, %v658, %v654
    %v660 = vlaneseq
    %v661 = vshrl.u32 %v660, 7
    %v662 = vsub.s32 %v539, %v661
    %v663 = vrot.slane %v385, %v662
    %v664 = vsel %vm544, %v663, %v659
    %v665 = vlaneseq
    %v666 = vshrl.u32 %v665, 7
    %v667 = vsub.s32 %v546, %v666
    %v668 = vrot.slane %v386, %v667
    %v669 = vsel %vm551, %v668, %v664
    %v670 = vlaneseq
    %v671 = vshrl.u32 %v670, 7
    %v672 = vsub.s32 %v499, %v671
    %v673 = vrot.slane %v387, %v672
    %v674 = vlaneseq
    %v675 = vshrl.u32 %v674, 7
    %v676 = vsub.s32 %v504, %v675
    %v677 = vrot.slane %v388, %v676
    %v678 = vsel %vm509, %v677, %v673
    %v679 = vlaneseq
    %v680 = vshrl.u32 %v679, 7
    %v681 = vsub.s32 %v511, %v680
    %v682 = vrot.slane %v389, %v681
    %v683 = vsel %vm516, %v682, %v678
    %v684 = vlaneseq
    %v685 = vshrl.u32 %v684, 7
    %v686 = vsub.s32 %v518, %v685
    %v687 = vrot.slane %v390, %v686
    %v688 = vsel %vm523, %v687, %v683
    %v689 = vlaneseq
    %v690 = vshrl.u32 %v689, 7
    %v691 = vsub.s32 %v525, %v690
    %v692 = vrot.slane %v391, %v691
    %v693 = vsel %vm530, %v692, %v688
    %v694 = vlaneseq
    %v695 = vshrl.u32 %v694, 7
    %v696 = vsub.s32 %v532, %v695
    %v697 = vrot.slane %v392, %v696
    %v698 = vsel %vm537, %v697, %v693
    %v699 = vlaneseq
    %v700 = vshrl.u32 %v699, 7
    %v701 = vsub.s32 %v539, %v700
    %v702 = vrot.slane %v393, %v701
    %v703 = vsel %vm544, %v702, %v698
    %v704 = vlaneseq
    %v705 = vshrl.u32 %v704, 7
    %v706 = vsub.s32 %v546, %v705
    %v707 = vrot.slane %v394, %v706
    %v708 = vsel %vm551, %v707, %v703
    %v709 = vlaneseq
    %v710 = vshrl.u32 %v709, 7
    %v711 = vsub.s32 %v499, %v710
    %v712 = vrot.slane %v395, %v711
    %v713 = vlaneseq
    %v714 = vshrl.u32 %v713, 7
    %v715 = vsub.s32 %v504, %v714
    %v716 = vrot.slane %v396, %v715
    %v717 = vsel %vm509, %v716, %v712
    %v718 = vlaneseq
    %v719 = vshrl.u32 %v718, 7
    %v720 = vsub.s32 %v511, %v719
    %v721 = vrot.slane %v397, %v720
    %v722 = vsel %vm516, %v721, %v717
    %v723 = vlaneseq
    %v724 = vshrl.u32 %v723, 7
    %v725 = vsub.s32 %v518, %v724
    %v726 = vrot.slane %v398, %v725
    %v727 = vsel %vm523, %v726, %v722
    %v728 = vlaneseq
    %v729 = vshrl.u32 %v728, 7
    %v730 = vsub.s32 %v525, %v729
    %v731 = vrot.slane %v399, %v730
    %v732 = vsel %vm530, %v731, %v727
    %v733 = vlaneseq
    %v734 = vshrl.u32 %v733, 7
    %v735 = vsub.s32 %v532, %v734
    %v736 = vrot.slane %v400, %v735
    %v737 = vsel %vm537, %v736, %v732
    %v738 = vlaneseq
    %v739 = vshrl.u32 %v738, 7
    %v740 = vsub.s32 %v539, %v739
    %v741 = vrot.slane %v401, %v740
    %v742 = vsel %vm544, %v741, %v737
    %v743 = vlaneseq
    %v744 = vshrl.u32 %v743, 7
    %v745 = vsub.s32 %v546, %v744
    %v746 = vrot.slane %v402, %v745
    %v747 = vsel %vm551, %v746, %v742
    %v748 = vlaneseq
    %v749 = vshrl.u32 %v748, 7
    %v750 = vsub.s32 %v499, %v749
    %v751 = vrot.slane %v403, %v750
    %v752 = vlaneseq
    %v753 = vshrl.u32 %v752, 7
    %v754 = vsub.s32 %v504, %v753
    %v755 = vrot.slane %v404, %v754
    %v756 = vsel %vm509, %v755, %v751
    %v757 = vlaneseq
    %v758 = vshrl.u32 %v757, 7
    %v759 = vsub.s32 %v511, %v758
    %v760 = vrot.slane %v405, %v759
    %v761 = vsel %vm516, %v760, %v756
    %v762 = vlaneseq
    %v763 = vshrl.u32 %v762, 7
    %v764 = vsub.s32 %v518, %v763
    %v765 = vrot.slane %v406, %v764
    %v766 = vsel %vm523, %v765, %v761
    %v767 = vlaneseq
    %v768 = vshrl.u32 %v767, 7
    %v769 = vsub.s32 %v525, %v768
    %v770 = vrot.slane %v407, %v769
    %v771 = vsel %vm530, %v770, %v766
    %v772 = vlaneseq
    %v773 = vshrl.u32 %v772, 7
    %v774 = vsub.s32 %v532, %v773
    %v775 = vrot.slane %v408, %v774
    %v776 = vsel %vm537, %v775, %v771
    %v777 = vlaneseq
    %v778 = vshrl.u32 %v777, 7
    %v779 = vsub.s32 %v539, %v778
    %v780 = vrot.slane %v409, %v779
    %v781 = vsel %vm544, %v780, %v776
    %v782 = vlaneseq
    %v783 = vshrl.u32 %v782, 7
    %v784 = vsub.s32 %v546, %v783
    %v785 = vrot.slane %v410, %v784
    %v786 = vsel %vm551, %v785, %v781
    %v787 = vlaneseq
    %v788 = vshrl.u32 %v787, 7
    %v789 = vsub.s32 %v499, %v788
    %v790 = vrot.slane %v411, %v789
    %v791 = vlaneseq
    %v792 = vshrl.u32 %v791, 7
    %v793 = vsub.s32 %v504, %v792
    %v794 = vrot.slane %v412, %v793
    %v795 = vsel %vm509, %v794, %v790
    %v796 = vlaneseq
    %v797 = vshrl.u32 %v796, 7
    %v798 = vsub.s32 %v511, %v797
    %v799 = vrot.slane %v413, %v798
    %v800 = vsel %vm516, %v799, %v795
    %v801 = vlaneseq
    %v802 = vshrl.u32 %v801, 7
    %v803 = vsub.s32 %v518, %v802
    %v804 = vrot.slane %v414, %v803
    %v805 = vsel %vm523, %v804, %v800
    %v806 = vlaneseq
    %v807 = vshrl.u32 %v806, 7
    %v808 = vsub.s32 %v525, %v807
    %v809 = vrot.slane %v415, %v808
    %v810 = vsel %vm530, %v809, %v805
    %v811 = vlaneseq
    %v812 = vshrl.u32 %v811, 7
    %v813 = vsub.s32 %v532, %v812
    %v814 = vrot.slane %v416, %v813
    %v815 = vsel %vm537, %v814, %v810
    %v816 = vlaneseq
    %v817 = vshrl.u32 %v816, 7
    %v818 = vsub.s32 %v539, %v817
    %v819 = vrot.slane %v417, %v818
    %v820 = vsel %vm544, %v819, %v815
    %v821 = vlaneseq
    %v822 = vshrl.u32 %v821, 7
    %v823 = vsub.s32 %v546, %v822
    %v824 = vrot.slane %v418, %v823
    %v825 = vsel %vm551, %v824, %v820
    %vm826 = vcmask 1041409
    %v827 = vsel %vm826, %v591, %v552
    %vm828 = vcmask 1042434
    %v829 = vsel %vm828, %v630, %v827
    %vm830 = vcmask 1043459
    %v831 = vsel %vm830, %v669, %v829
    %vm832 = vcmask 1044484
    %v833 = vsel %vm832, %v708, %v831
    %vm834 = vcmask 1045509
    %v835 = vsel %vm834, %v747, %v833
    %vm836 = vcmask 1046534
    %v837 = vsel %vm836, %v786, %v835
    %vm838 = vcmask 1047559
    %v839 = vsel %vm838, %v825, %v837
    %vm840 = vcmask 523264
    %v841 = vsel %vm840, %v839, 0
    %843 = vmatprep.subr.mxu0 0.0
    %844 = vmatpush1.msra.mxu0 %v419
    %845 = vmatprep.subr.mxu0 0.0
    %846 = vmatpush1.msra.mxu0 %v420
    %847 = vmatprep.subr.mxu0 0.0
    %848 = vmatpush1.msra.mxu0 %v421
    %849 = vmatprep.subr.mxu0 0.0
    %850 = vmatpush1.msra.mxu0 %v422
    %851 = vmatprep.subr.mxu0 0.0
    %852 = vmatpush1.msra.mxu0 %v423
    %853 = vmatprep.subr.mxu0 0.0
    %854 = vmatpush1.msra.mxu0 %v424
    %855 = vmatprep.subr.mxu0 0.0
    %856 = vmatpush1.msra.mxu0 %v425
    %857 = vmatprep.subr.mxu0 0.0
    %858 = vmatpush1.msra.mxu0 %v426
    %859 = vmatprep.subr.mxu0 0.0
    %860 = vmatpush1.msra.mxu0 0.0
    %861 = vmatprep.subr.mxu0 0.0
    %862 = vmatpush1.msra.mxu0 0.0
    %863 = vmatprep.subr.mxu0 0.0
    %864 = vmatpush1.msra.mxu0 0.0
    %865 = vmatprep.subr.mxu0 0.0
    %866 = vmatpush1.msra.mxu0 0.0
    %867 = vmatprep.subr.mxu0 0.0
    %868 = vmatpush1.msra.mxu0 0.0
    %869 = vmatprep.subr.mxu0 0.0
    %870 = vmatpush1.msra.mxu0 0.0
    %871 = vmatprep.subr.mxu0 0.0
    %872 = vmatpush1.msra.mxu0 0.0
    %873 = vmatprep.subr.mxu0 0.0
    %874 = vmatpush1.msra.mxu0 0.0
    %875 = vmatprep.subr.mxu0 0.0
    %876 = vmatpush1.msra.mxu0 0.0
    %877 = vmatprep.subr.mxu0 0.0
    %878 = vmatpush1.msra.mxu0 0.0
    %879 = vmatprep.subr.mxu0 0.0
    %880 = vmatpush1.msra.mxu0 0.0
    %881 = vmatprep.subr.mxu0 0.0
    %882 = vmatpush1.msra.mxu0 0.0
    %883 = vmatprep.subr.mxu0 0.0
    %884 = vmatpush1.msra.mxu0 0.0
    %885 = vmatprep.subr.mxu0 0.0
    %886 = vmatpush1.msra.mxu0 0.0
    %887 = vmatprep.subr.mxu0 0.0
    %888 = vmatpush1.msra.mxu0 0.0
    %889 = vmatprep.subr.mxu0 0.0
    %890 = vmatpush1.msra.mxu0 0.0
    %891 = vmatprep.subr.mxu0 0.0
    %892 = vmatpush1.msra.mxu0 0.0
    %893 = vmatprep.subr.mxu0 0.0
    %894 = vmatpush1.msra.mxu0 0.0
    %895 = vmatprep.subr.mxu0 0.0
    %896 = vmatpush1.msra.mxu0 0.0
    %897 = vmatprep.subr.mxu0 0.0
    %898 = vmatpush1.msra.mxu0 0.0
    %899 = vmatprep.subr.mxu0 0.0
    %900 = vmatpush1.msra.mxu0 0.0
    %901 = vmatprep.subr.mxu0 0.0
    %902 = vmatpush1.msra.mxu0 0.0
    %903 = vmatprep.subr.mxu0 0.0
    %904 = vmatpush1.msra.mxu0 0.0
    %905 = vmatprep.subr.mxu0 0.0
    %906 = vmatpush1.msra.mxu0 0.0
    %907 = vmatprep.mubr.f32.mxu0 0.0
    %908 = vmatmul.mubr.f32.gmra.mrb[0].mxu0 %v841
    %v909 = vpop.f32.mrb[0].mxu0
    %v910 = vadd.f32 %v432, %v909
    %v911 = vpop.f32.mrb[0].mxu0
    %912 = vdwg.mxu0
    %v913 = vmax.f32 %v910, 0.0
    %v914 = vld [vmem:[%s3] sm:$0xf]
    %v915 = vld [vmem:[%s4] sm:$0x1]
    %v917 = vlaneseq
    %v918 = vshrl.u32 %v917, 7
    %v919 = vsub.s32 0, %v918
    %v920 = vrot.slane %v915, %v919
    %vm922 = vcmask 31744
    %v924 = vsel %vm922, %v913, 0
    %vm926 = vcmask 1043456
    %v928 = vsel %vm926, %v914, 0
    %930 = vmatprep.subr.mxu0 0.0
    %931 = vmatpush1.msra.mxu0 %v928
    %932 = vmatprep.subr.mxu0 0.0
    %933 = vmatpush1.msra.mxu0 0.0
    %934 = vmatprep.subr.mxu0 0.0
    %935 = vmatpush1.msra.mxu0 0.0
    %936 = vmatprep.subr.mxu0 0.0
    %937 = vmatpush1.msra.mxu0 0.0
    %938 = vmatprep.subr.mxu0 0.0
    %939 = vmatpush1.msra.mxu0 0.0
    %940 = vmatprep.subr.mxu0 0.0
    %941 = vmatpush1.msra.mxu0 0.0
    %942 = vmatprep.subr.mxu0 0.0
    %943 = vmatpush1.msra.mxu0 0.0
    %944 = vmatprep.subr.mxu0 0.0
    %945 = vmatpush1.msra.mxu0 0.0
    %946 = vmatprep.subr.mxu0 0.0
    %947 = vmatpush1.msra.mxu0 0.0
    %948 = vmatprep.subr.mxu0 0.0
    %949 = vmatpush1.msra.mxu0 0.0
    %950 = vmatprep.subr.mxu0 0.0
    %951 = vmatpush1.msra.mxu0 0.0
    %952 = vmatprep.subr.mxu0 0.0
    %953 = vmatpush1.msra.mxu0 0.0
    %954 = vmatprep.subr.mxu0 0.0
    %955 = vmatpush1.msra.mxu0 0.0
    %956 = vmatprep.subr.mxu0 0.0
    %957 = vmatpush1.msra.mxu0 0.0
    %958 = vmatprep.subr.mxu0 0.0
    %959 = vmatpush1.msra.mxu0 0.0
    %960 = vmatprep.subr.mxu0 0.0
    %961 = vmatpush1.msra.mxu0 0.0
    %962 = vmatprep.subr.mxu0 0.0
    %963 = vmatpush1.msra.mxu0 0.0
    %964 = vmatprep.subr.mxu0 0.0
    %965 = vmatpush1.msra.mxu0 0.0
    %966 = vmatprep.subr.mxu0 0.0
    %967 = vmatpush1.msra.mxu0 0.0
    %968 = vmatprep.subr.mxu0 0.0
    %969 = vmatpush1.msra.mxu0 0.0
    %970 = vmatprep.subr.mxu0 0.0
    %971 = vmatpush1.msra.mxu0 0.0
    %972 = vmatprep.subr.mxu0 0.0
    %973 = vmatpush1.msra.mxu0 0.0
    %974 = vmatprep.subr.mxu0 0.0
    %975 = vmatpush1.msra.mxu0 0.0
    %976 = vmatprep.subr.mxu0 0.0
    %977 = vmatpush1.msra.mxu0 0.0
    %978 = vmatprep.subr.mxu0 0.0
    %979 = vmatpush1.msra.mxu0 0.0
    %980 = vmatprep.subr.mxu0 0.0
    %981 = vmatpush1.msra.mxu0 0.0
    %982 = vmatprep.subr.mxu0 0.0
    %983 = vmatpush1.msra.mxu0 0.0
    %984 = vmatprep.subr.mxu0 0.0
    %985 = vmatpush1.msra.mxu0 0.0
    %986 = vmatprep.subr.mxu0 0.0
    %987 = vmatpush1.msra.mxu0 0.0
    %988 = vmatprep.subr.mxu0 0.0
    %989 = vmatpush1.msra.mxu0 0.0
    %990 = vmatprep.subr.mxu0 0.0
    %991 = vmatpush1.msra.mxu0 0.0
    %992 = vmatprep.subr.mxu0 0.0
    %993 = vmatpush1.msra.mxu0 0.0
    %994 = vmatprep.mubr.f32.mxu0 0.0
    %995 = vmatmul.mubr.f32.gmra.mrb[0].mxu0 %v924
    %v996 = vpop.f32.mrb[0].mxu0
    %v997 = vadd.f32 %v920, %v996
    %v998 = vpop.f32.mrb[0].mxu0
    %999 = vdwg.mxu0
    %v1000 = vxor.u32 %v997, 2147483648
    %v1001 = vmul.f32 %v1000, 1.442695
    %v1002 = vpow.pop %v1001
    %v1003 = vadd.f32 %v1002, 1.0
    %v1004 = vrcp.pop %v1003
    %v1005 = vmul.f32 1.0, %v1004
    %v1006 = vlaneseq
    %v1007 = vshrl.u32 %v1006, 7
    %v1008 = vsub.s32 0, %v1007
    %v1009 = vrot.slane %v1005, %v1008
    %1011 = vbcast.lane.b32.xlu0 %v1009, 256
    %v1012 = vpop.permute.xlu0 %1011
    %s1014 = sor.u32 256, 8
    %1015 = vbcast.lane.b32.xlu0 %v1009, %s1014
    %v1016 = vpop.permute.xlu0 %1015
    %s1018 = sor.u32 256, 16
    %1019 = vbcast.lane.b32.xlu0 %v1009, %s1018
    %v1020 = vpop.permute.xlu0 %1019
    %s1022 = sor.u32 256, 24
    %1023 = vbcast.lane.b32.xlu0 %v1009, %s1022
    %v1024 = vpop.permute.xlu0 %1023
    %s1026 = sor.u32 256, 32
    %1027 = vbcast.lane.b32.xlu0 %v1009, %s1026
    %v1028 = vpop.permute.xlu0 %1027
    %s1030 = sor.u32 256, 40
    %1031 = vbcast.lane.b32.xlu0 %v1009, %s1030
    %v1032 = vpop.permute.xlu0 %1031
    %s1034 = sor.u32 256, 48
    %1035 = vbcast.lane.b32.xlu0 %v1009, %s1034
    %v1036 = vpop.permute.xlu0 %1035
    %s1038 = sor.u32 256, 56
    %1039 = vbcast.lane.b32.xlu0 %v1009, %s1038
    %v1040 = vpop.permute.xlu0 %1039
    %v1041 = vlaneseq
    %v1042 = vshrl.u32 %v1041, 7
    %v1043 = vsub.s32 1, %v1042
    %v1044 = vrot.slane %v1005, %v1043
    %1046 = vbcast.lane.b32.xlu0 %v1044, 256
    %v1047 = vpop.permute.xlu0 %1046
    %s1049 = sor.u32 256, 8
    %1050 = vbcast.lane.b32.xlu0 %v1044, %s1049
    %v1051 = vpop.permute.xlu0 %1050
    %s1053 = sor.u32 256, 16
    %1054 = vbcast.lane.b32.xlu0 %v1044, %s1053
    %v1055 = vpop.permute.xlu0 %1054
    %s1057 = sor.u32 256, 24
    %1058 = vbcast.lane.b32.xlu0 %v1044, %s1057
    %v1059 = vpop.permute.xlu0 %1058
    %s1061 = sor.u32 256, 32
    %1062 = vbcast.lane.b32.xlu0 %v1044, %s1061
    %v1063 = vpop.permute.xlu0 %1062
    %s1065 = sor.u32 256, 40
    %1066 = vbcast.lane.b32.xlu0 %v1044, %s1065
    %v1067 = vpop.permute.xlu0 %1066
    %s1069 = sor.u32 256, 48
    %1070 = vbcast.lane.b32.xlu0 %v1044, %s1069
    %v1071 = vpop.permute.xlu0 %1070
    %s1073 = sor.u32 256, 56
    %1074 = vbcast.lane.b32.xlu0 %v1044, %s1073
    %v1075 = vpop.permute.xlu0 %1074
    %v1076 = vlaneseq
    %v1077 = vshrl.u32 %v1076, 7
    %v1078 = vsub.s32 2, %v1077
    %v1079 = vrot.slane %v1005, %v1078
    %1081 = vbcast.lane.b32.xlu0 %v1079, 256
    %v1082 = vpop.permute.xlu0 %1081
    %s1084 = sor.u32 256, 8
    %1085 = vbcast.lane.b32.xlu0 %v1079, %s1084
    %v1086 = vpop.permute.xlu0 %1085
    %s1088 = sor.u32 256, 16
    %1089 = vbcast.lane.b32.xlu0 %v1079, %s1088
    %v1090 = vpop.permute.xlu0 %1089
    %s1092 = sor.u32 256, 24
    %1093 = vbcast.lane.b32.xlu0 %v1079, %s1092
    %v1094 = vpop.permute.xlu0 %1093
    %s1096 = sor.u32 256, 32
    %1097 = vbcast.lane.b32.xlu0 %v1079, %s1096
    %v1098 = vpop.permute.xlu0 %1097
    %s1100 = sor.u32 256, 40
    %1101 = vbcast.lane.b32.xlu0 %v1079, %s1100
    %v1102 = vpop.permute.xlu0 %1101
    %s1104 = sor.u32 256, 48
    %1105 = vbcast.lane.b32.xlu0 %v1079, %s1104
    %v1106 = vpop.permute.xlu0 %1105
    %s1108 = sor.u32 256, 56
    %1109 = vbcast.lane.b32.xlu0 %v1079, %s1108
    %v1110 = vpop.permute.xlu0 %1109
    %v1111 = vlaneseq
    %v1112 = vshrl.u32 %v1111, 7
    %v1113 = vsub.s32 3, %v1112
    %v1114 = vrot.slane %v1005, %v1113
    %1116 = vbcast.lane.b32.xlu0 %v1114, 256
    %v1117 = vpop.permute.xlu0 %1116
    %s1119 = sor.u32 256, 8
    %1120 = vbcast.lane.b32.xlu0 %v1114, %s1119
    %v1121 = vpop.permute.xlu0 %1120
    %s1123 = sor.u32 256, 16
    %1124 = vbcast.lane.b32.xlu0 %v1114, %s1123
    %v1125 = vpop.permute.xlu0 %1124
    %s1127 = sor.u32 256, 24
    %1128 = vbcast.lane.b32.xlu0 %v1114, %s1127
    %v1129 = vpop.permute.xlu0 %1128
    %s1131 = sor.u32 256, 32
    %1132 = vbcast.lane.b32.xlu0 %v1114, %s1131
    %v1133 = vpop.permute.xlu0 %1132
    %s1135 = sor.u32 256, 40
    %1136 = vbcast.lane.b32.xlu0 %v1114, %s1135
    %v1137 = vpop.permute.xlu0 %1136
    %s1139 = sor.u32 256, 48
    %1140 = vbcast.lane.b32.xlu0 %v1114, %s1139
    %v1141 = vpop.permute.xlu0 %1140
    %s1143 = sor.u32 256, 56
    %1144 = vbcast.lane.b32.xlu0 %v1114, %s1143
    %v1145 = vpop.permute.xlu0 %1144
    %v1146 = vlaneseq
    %v1147 = vshrl.u32 %v1146, 7
    %v1148 = vsub.s32 4, %v1147
    %v1149 = vrot.slane %v1005, %v1148
    %1151 = vbcast.lane.b32.xlu0 %v1149, 256
    %v1152 = vpop.permute.xlu0 %1151
    %s1154 = sor.u32 256, 8
    %1155 = vbcast.lane.b32.xlu0 %v1149, %s1154
    %v1156 = vpop.permute.xlu0 %1155
    %s1158 = sor.u32 256, 16
    %1159 = vbcast.lane.b32.xlu0 %v1149, %s1158
    %v1160 = vpop.permute.xlu0 %1159
    %s1162 = sor.u32 256, 24
    %1163 = vbcast.lane.b32.xlu0 %v1149, %s1162
    %v1164 = vpop.permute.xlu0 %1163
    %s1166 = sor.u32 256, 32
    %1167 = vbcast.lane.b32.xlu0 %v1149, %s1166
    %v1168 = vpop.permute.xlu0 %1167
    %s1170 = sor.u32 256, 40
    %1171 = vbcast.lane.b32.xlu0 %v1149, %s1170
    %v1172 = vpop.permute.xlu0 %1171
    %s1174 = sor.u32 256, 48
    %1175 = vbcast.lane.b32.xlu0 %v1149, %s1174
    %v1176 = vpop.permute.xlu0 %1175
    %s1178 = sor.u32 256, 56
    %1179 = vbcast.lane.b32.xlu0 %v1149, %s1178
    %v1180 = vpop.permute.xlu0 %1179
    %v1181 = vlaneseq
    %v1182 = vshrl.u32 %v1181, 7
    %v1183 = vsub.s32 5, %v1182
    %v1184 = vrot.slane %v1005, %v1183
    %1186 = vbcast.lane.b32.xlu0 %v1184, 256
    %v1187 = vpop.permute.xlu0 %1186
    %s1189 = sor.u32 256, 8
    %1190 = vbcast.lane.b32.xlu0 %v1184, %s1189
    %v1191 = vpop.permute.xlu0 %1190
    %s1193 = sor.u32 256, 16
    %1194 = vbcast.lane.b32.xlu0 %v1184, %s1193
    %v1195 = vpop.permute.xlu0 %1194
    %s1197 = sor.u32 256, 24
    %1198 = vbcast.lane.b32.xlu0 %v1184, %s1197
    %v1199 = vpop.permute.xlu0 %1198
    %s1201 = sor.u32 256, 32
    %1202 = vbcast.lane.b32.xlu0 %v1184, %s1201
    %v1203 = vpop.permute.xlu0 %1202
    %s1205 = sor.u32 256, 40
    %1206 = vbcast.lane.b32.xlu0 %v1184, %s1205
    %v1207 = vpop.permute.xlu0 %1206
    %s1209 = sor.u32 256, 48
    %1210 = vbcast.lane.b32.xlu0 %v1184, %s1209
    %v1211 = vpop.permute.xlu0 %1210
    %s1213 = sor.u32 256, 56
    %1214 = vbcast.lane.b32.xlu0 %v1184, %s1213
    %v1215 = vpop.permute.xlu0 %1214
    %v1216 = vlaneseq
    %v1217 = vshrl.u32 %v1216, 7
    %v1218 = vsub.s32 6, %v1217
    %v1219 = vrot.slane %v1005, %v1218
    %1221 = vbcast.lane.b32.xlu0 %v1219, 256
    %v1222 = vpop.permute.xlu0 %1221
    %s1224 = sor.u32 256, 8
    %1225 = vbcast.lane.b32.xlu0 %v1219, %s1224
    %v1226 = vpop.permute.xlu0 %1225
    %s1228 = sor.u32 256, 16
    %1229 = vbcast.lane.b32.xlu0 %v1219, %s1228
    %v1230 = vpop.permute.xlu0 %1229
    %s1232 = sor.u32 256, 24
    %1233 = vbcast.lane.b32.xlu0 %v1219, %s1232
    %v1234 = vpop.permute.xlu0 %1233
    %s1236 = sor.u32 256, 32
    %1237 = vbcast.lane.b32.xlu0 %v1219, %s1236
    %v1238 = vpop.permute.xlu0 %1237
    %s1240 = sor.u32 256, 40
    %1241 = vbcast.lane.b32.xlu0 %v1219, %s1240
    %v1242 = vpop.permute.xlu0 %1241
    %s1244 = sor.u32 256, 48
    %1245 = vbcast.lane.b32.xlu0 %v1219, %s1244
    %v1246 = vpop.permute.xlu0 %1245
    %s1248 = sor.u32 256, 56
    %1249 = vbcast.lane.b32.xlu0 %v1219, %s1248
    %v1250 = vpop.permute.xlu0 %1249
    %v1251 = vlaneseq
    %v1252 = vshrl.u32 %v1251, 7
    %v1253 = vsub.s32 7, %v1252
    %v1254 = vrot.slane %v1005, %v1253
    %1256 = vbcast.lane.b32.xlu0 %v1254, 256
    %v1257 = vpop.permute.xlu0 %1256
    %s1259 = sor.u32 256, 8
    %1260 = vbcast.lane.b32.xlu0 %v1254, %s1259
    %v1261 = vpop.permute.xlu0 %1260
    %s1263 = sor.u32 256, 16
    %1264 = vbcast.lane.b32.xlu0 %v1254, %s1263
    %v1265 = vpop.permute.xlu0 %1264
    %s1267 = sor.u32 256, 24
    %1268 = vbcast.lane.b32.xlu0 %v1254, %s1267
    %v1269 = vpop.permute.xlu0 %1268
    %s1271 = sor.u32 256, 32
    %1272 = vbcast.lane.b32.xlu0 %v1254, %s1271
    %v1273 = vpop.permute.xlu0 %1272
    %s1275 = sor.u32 256, 40
    %1276 = vbcast.lane.b32.xlu0 %v1254, %s1275
    %v1277 = vpop.permute.xlu0 %1276
    %s1279 = sor.u32 256, 48
    %1280 = vbcast.lane.b32.xlu0 %v1254, %s1279
    %v1281 = vpop.permute.xlu0 %1280
    %s1283 = sor.u32 256, 56
    %1284 = vbcast.lane.b32.xlu0 %v1254, %s1283
    %v1285 = vpop.permute.xlu0 %1284
    %v1286 = vmul.f32 %v35, %v1012
    %v1287 = vmul.f32 %v36, %v1012
    %v1288 = vmul.f32 %v37, %v1016
    %v1289 = vmul.f32 %v38, %v1016
    %v1290 = vmul.f32 %v39, %v1020
    %v1291 = vmul.f32 %v40, %v1020
    %v1292 = vmul.f32 %v41, %v1024
    %v1293 = vmul.f32 %v42, %v1024
    %v1294 = vmul.f32 %v43, %v1028
    %v1295 = vmul.f32 %v44, %v1028
    %v1296 = vmul.f32 %v45, %v1032
    %v1297 = vmul.f32 %v46, %v1032
    %v1298 = vmul.f32 %v47, %v1036
    %v1299 = vmul.f32 %v48, %v1036
    %v1300 = vmul.f32 %v49, %v1040
    %v1301 = vmul.f32 %v50, %v1040
    %v1302 = vmul.f32 %v51, %v1047
    %v1303 = vmul.f32 %v52, %v1047
    %v1304 = vmul.f32 %v53, %v1051
    %v1305 = vmul.f32 %v54, %v1051
    %v1306 = vmul.f32 %v55, %v1055
    %v1307 = vmul.f32 %v56, %v1055
    %v1308 = vmul.f32 %v57, %v1059
    %v1309 = vmul.f32 %v58, %v1059
    %v1310 = vmul.f32 %v59, %v1063
    %v1311 = vmul.f32 %v60, %v1063
    %v1312 = vmul.f32 %v61, %v1067
    %v1313 = vmul.f32 %v62, %v1067
    %v1314 = vmul.f32 %v63, %v1071
    %v1315 = vmul.f32 %v64, %v1071
    %v1316 = vmul.f32 %v65, %v1075
    %v1317 = vmul.f32 %v66, %v1075
    %v1318 = vmul.f32 %v67, %v1082
    %v1319 = vmul.f32 %v68, %v1082
    %v1320 = vmul.f32 %v69, %v1086
    %v1321 = vmul.f32 %v70, %v1086
    %v1322 = vmul.f32 %v71, %v1090
    %v1323 = vmul.f32 %v72, %v1090
    %v1324 = vmul.f32 %v73, %v1094
    %v1325 = vmul.f32 %v74, %v1094
    %v1326 = vmul.f32 %v75, %v1098
    %v1327 = vmul.f32 %v76, %v1098
    %v1328 = vmul.f32 %v77, %v1102
    %v1329 = vmul.f32 %v78, %v1102
    %v1330 = vmul.f32 %v79, %v1106
    %v1331 = vmul.f32 %v80, %v1106
    %v1332 = vmul.f32 %v81, %v1110
    %v1333 = vmul.f32 %v82, %v1110
    %v1334 = vmul.f32 %v83, %v1117
    %v1335 = vmul.f32 %v84, %v1117
    %v1336 = vmul.f32 %v85, %v1121
    %v1337 = vmul.f32 %v86, %v1121
    %v1338 = vmul.f32 %v87, %v1125
    %v1339 = vmul.f32 %v88, %v1125
    %v1340 = vmul.f32 %v89, %v1129
    %v1341 = vmul.f32 %v90, %v1129
    %v1342 = vmul.f32 %v91, %v1133
    %v1343 = vmul.f32 %v92, %v1133
    %v1344 = vmul.f32 %v93, %v1137
    %v1345 = vmul.f32 %v94, %v1137
    %v1346 = vmul.f32 %v95, %v1141
    %v1347 = vmul.f32 %v96, %v1141
    %v1348 = vmul.f32 %v97, %v1145
    %v1349 = vmul.f32 %v98, %v1145
    %v1350 = vmul.f32 %v99, %v1152
    %v1351 = vmul.f32 %v100, %v1152
    %v1352 = vmul.f32 %v101, %v1156
    %v1353 = vmul.f32 %v102, %v1156
    %v1354 = vmul.f32 %v103, %v1160
    %v1355 = vmul.f32 %v104, %v1160
    %v1356 = vmul.f32 %v105, %v1164
    %v1357 = vmul.f32 %v106, %v1164
    %v1358 = vmul.f32 %v107, %v1168
    %v1359 = vmul.f32 %v108, %v1168
    %v1360 = vmul.f32 %v109, %v1172
    %v1361 = vmul.f32 %v110, %v1172
    %v1362 = vmul.f32 %v111, %v1176
    %v1363 = vmul.f32 %v112, %v1176
    %v1364 = vmul.f32 %v113, %v1180
    %v1365 = vmul.f32 %v114, %v1180
    %v1366 = vmul.f32 %v115, %v1187
    %v1367 = vmul.f32 %v116, %v1187
    %v1368 = vmul.f32 %v117, %v1191
    %v1369 = vmul.f32 %v118, %v1191
    %v1370 = vmul.f32 %v119, %v1195
    %v1371 = vmul.f32 %v120, %v1195
    %v1372 = vmul.f32 %v121, %v1199
    %v1373 = vmul.f32 %v122, %v1199
    %v1374 = vmul.f32 %v123, %v1203
    %v1375 = vmul.f32 %v124, %v1203
    %v1376 = vmul.f32 %v125, %v1207
    %v1377 = vmul.f32 %v126, %v1207
    %v1378 = vmul.f32 %v127, %v1211
    %v1379 = vmul.f32 %v128, %v1211
    %v1380 = vmul.f32 %v129, %v1215
    %v1381 = vmul.f32 %v130, %v1215
    %v1382 = vmul.f32 %v131, %v1222
    %v1383 = vmul.f32 %v132, %v1222
    %v1384 = vmul.f32 %v133, %v1226
    %v1385 = vmul.f32 %v134, %v1226
    %v1386 = vmul.f32 %v135, %v1230
    %v1387 = vmul.f32 %v136, %v1230
    %v1388 = vmul.f32 %v137, %v1234
    %v1389 = vmul.f32 %v138, %v1234
    %v1390 = vmul.f32 %v139, %v1238
    %v1391 = vmul.f32 %v140, %v1238
    %v1392 = vmul.f32 %v141, %v1242
    %v1393 = vmul.f32 %v142, %v1242
    %v1394 = vmul.f32 %v143, %v1246
    %v1395 = vmul.f32 %v144, %v1246
    %v1396 = vmul.f32 %v145, %v1250
    %v1397 = vmul.f32 %v146, %v1250
    %v1398 = vmul.f32 %v147, %v1257
    %v1399 = vmul.f32 %v148, %v1257
    %v1400 = vmul.f32 %v149, %v1261
    %v1401 = vmul.f32 %v150, %v1261
    %v1402 = vmul.f32 %v151, %v1265
    %v1403 = vmul.f32 %v152, %v1265
    %v1404 = vmul.f32 %v153, %v1269
    %v1405 = vmul.f32 %v154, %v1269
    %v1406 = vmul.f32 %v155, %v1273
    %v1407 = vmul.f32 %v156, %v1273
    %v1408 = vmul.f32 %v157, %v1277
    %v1409 = vmul.f32 %v158, %v1277
    %v1410 = vmul.f32 %v159, %v1281
    %v1411 = vmul.f32 %v160, %v1281
    %v1412 = vmul.f32 %v161, %v1285
    %v1413 = vmul.f32 %v162, %v1285
    %1414 = vst [vmem:[#allocation5] sm:$0xff] %v1286
    %1415 = vst [vmem:[#allocation5 + $0x8] sm:$0xff] %v1287
    %1416 = vst [vmem:[#allocation5 + $0x10] sm:$0xff] %v1288
    %1417 = vst [vmem:[#allocation5 + $0x18] sm:$0xff] %v1289
    %1418 = vst [vmem:[#allocation5 + $0x20] sm:$0xff] %v1290
    %1419 = vst [vmem:[#allocation5 + $0x28] sm:$0xff] %v1291
    %1420 = vst [vmem:[#allocation5 + $0x30] sm:$0xff] %v1292
    %1421 = vst [vmem:[#allocation5 + $0x38] sm:$0xff] %v1293
    %1422 = vst [vmem:[#allocation5 + $0x40] sm:$0xff] %v1294
    %1423 = vst [vmem:[#allocation5 + $0x48] sm:$0xff] %v1295
    %1424 = vst [vmem:[#allocation5 + $0x50] sm:$0xff] %v1296
    %1425 = vst [vmem:[#allocation5 + $0x58] sm:$0xff] %v1297
    %1426 = vst [vmem:[#allocation5 + $0x60] sm:$0xff] %v1298
    %1427 = vst [vmem:[#allocation5 + $0x68] sm:$0xff] %v1299
    %1428 = vst [vmem:[#allocation5 + $0x70] sm:$0xff] %v1300
    %1429 = vst [vmem:[#allocation5 + $0x78] sm:$0xff] %v1301
    %1430 = vst [vmem:[#allocation5 + $0x80] sm:$0xff] %v1302
    %1431 = vst [vmem:[#allocation5 + $0x88] sm:$0xff] %v1303
    %1432 = vst [vmem:[#allocation5 + $0x90] sm:$0xff] %v1304
    %1433 = vst [vmem:[#allocation5 + $0x98] sm:$0xff] %v1305
    %1434 = vst [vmem:[#allocation5 + $0xa0] sm:$0xff] %v1306
    %1435 = vst [vmem:[#allocation5 + $0xa8] sm:$0xff] %v1307
    %1436 = vst [vmem:[#allocation5 + $0xb0] sm:$0xff] %v1308
    %1437 = vst [vmem:[#allocation5 + $0xb8] sm:$0xff] %v1309
    %1438 = vst [vmem:[#allocation5 + $0xc0] sm:$0xff] %v1310
    %1439 = vst [vmem:[#allocation5 + $0xc8] sm:$0xff] %v1311
    %1440 = vst [vmem:[#allocation5 + $0xd0] sm:$0xff] %v1312
    %1441 = vst [vmem:[#allocation5 + $0xd8] sm:$0xff] %v1313
    %1442 = vst [vmem:[#allocation5 + $0xe0] sm:$0xff] %v1314
    %1443 = vst [vmem:[#allocation5 + $0xe8] sm:$0xff] %v1315
    %1444 = vst [vmem:[#allocation5 + $0xf0] sm:$0xff] %v1316
    %1445 = vst [vmem:[#allocation5 + $0xf8] sm:$0xff] %v1317
    %1446 = vst [vmem:[#allocation5 + $0x100] sm:$0xff] %v1318
    %1447 = vst [vmem:[#allocation5 + $0x108] sm:$0xff] %v1319
    %1448 = vst [vmem:[#allocation5 + $0x110] sm:$0xff] %v1320
    %1449 = vst [vmem:[#allocation5 + $0x118] sm:$0xff] %v1321
    %1450 = vst [vmem:[#allocation5 + $0x120] sm:$0xff] %v1322
    %1451 = vst [vmem:[#allocation5 + $0x128] sm:$0xff] %v1323
    %1452 = vst [vmem:[#allocation5 + $0x130] sm:$0xff] %v1324
    %1453 = vst [vmem:[#allocation5 + $0x138] sm:$0xff] %v1325
    %1454 = vst [vmem:[#allocation5 + $0x140] sm:$0xff] %v1326
    %1455 = vst [vmem:[#allocation5 + $0x148] sm:$0xff] %v1327
    %1456 = vst [vmem:[#allocation5 + $0x150] sm:$0xff] %v1328
    %1457 = vst [vmem:[#allocation5 + $0x158] sm:$0xff] %v1329
    %1458 = vst [vmem:[#allocation5 + $0x160] sm:$0xff] %v1330
    %1459 = vst [vmem:[#allocation5 + $0x168] sm:$0xff] %v1331
    %1460 = vst [vmem:[#allocation5 + $0x170] sm:$0xff] %v1332
    %1461 = vst [vmem:[#allocation5 + $0x178] sm:$0xff] %v1333
    %1462 = vst [vmem:[#allocation5 + $0x180] sm:$0xff] %v1334
    %1463 = vst [vmem:[#allocation5 + $0x188] sm:$0xff] %v1335
    %1464 = vst [vmem:[#allocation5 + $0x190] sm:$0xff] %v1336
    %1465 = vst [vmem:[#allocation5 + $0x198] sm:$0xff] %v1337
    %1466 = vst [vmem:[#allocation5 + $0x1a0] sm:$0xff] %v1338
    %1467 = vst [vmem:[#allocation5 + $0x1a8] sm:$0xff] %v1339
    %1468 = vst [vmem:[#allocation5 + $0x1b0] sm:$0xff] %v1340
    %1469 = vst [vmem:[#allocation5 + $0x1b8] sm:$0xff] %v1341
    %1470 = vst [vmem:[#allocation5 + $0x1c0] sm:$0xff] %v1342
    %1471 = vst [vmem:[#allocation5 + $0x1c8] sm:$0xff] %v1343
    %1472 = vst [vmem:[#allocation5 + $0x1d0] sm:$0xff] %v1344
    %1473 = vst [vmem:[#allocation5 + $0x1d8] sm:$0xff] %v1345
    %1474 = vst [vmem:[#allocation5 + $0x1e0] sm:$0xff] %v1346
    %1475 = vst [vmem:[#allocation5 + $0x1e8] sm:$0xff] %v1347
    %1476 = vst [vmem:[#allocation5 + $0x1f0] sm:$0xff] %v1348
    %1477 = vst [vmem:[#allocation5 + $0x1f8] sm:$0xff] %v1349
    %1478 = vst [vmem:[#allocation5 + $0x200] sm:$0xff] %v1350
    %1479 = vst [vmem:[#allocation5 + $0x208] sm:$0xff] %v1351
    %1480 = vst [vmem:[#allocation5 + $0x210] sm:$0xff] %v1352
    %1481 = vst [vmem:[#allocation5 + $0x218] sm:$0xff] %v1353
    %1482 = vst [vmem:[#allocation5 + $0x220] sm:$0xff] %v1354
    %1483 = vst [vmem:[#allocation5 + $0x228] sm:$0xff] %v1355
    %1484 = vst [vmem:[#allocation5 + $0x230] sm:$0xff] %v1356
    %1485 = vst [vmem:[#allocation5 + $0x238] sm:$0xff] %v1357
    %1486 = vst [vmem:[#allocation5 + $0x240] sm:$0xff] %v1358
    %1487 = vst [vmem:[#allocation5 + $0x248] sm:$0xff] %v1359
    %1488 = vst [vmem:[#allocation5 + $0x250] sm:$0xff] %v1360
    %1489 = vst [vmem:[#allocation5 + $0x258] sm:$0xff] %v1361
    %1490 = vst [vmem:[#allocation5 + $0x260] sm:$0xff] %v1362
    %1491 = vst [vmem:[#allocation5 + $0x268] sm:$0xff] %v1363
    %1492 = vst [vmem:[#allocation5 + $0x270] sm:$0xff] %v1364
    %1493 = vst [vmem:[#allocation5 + $0x278] sm:$0xff] %v1365
    %1494 = vst [vmem:[#allocation5 + $0x280] sm:$0xff] %v1366
    %1495 = vst [vmem:[#allocation5 + $0x288] sm:$0xff] %v1367
    %1496 = vst [vmem:[#allocation5 + $0x290] sm:$0xff] %v1368
    %1497 = vst [vmem:[#allocation5 + $0x298] sm:$0xff] %v1369
    %1498 = vst [vmem:[#allocation5 + $0x2a0] sm:$0xff] %v1370
    %1499 = vst [vmem:[#allocation5 + $0x2a8] sm:$0xff] %v1371
    %1500 = vst [vmem:[#allocation5 + $0x2b0] sm:$0xff] %v1372
    %1501 = vst [vmem:[#allocation5 + $0x2b8] sm:$0xff] %v1373
    %1502 = vst [vmem:[#allocation5 + $0x2c0] sm:$0xff] %v1374
    %1503 = vst [vmem:[#allocation5 + $0x2c8] sm:$0xff] %v1375
    %1504 = vst [vmem:[#allocation5 + $0x2d0] sm:$0xff] %v1376
    %1505 = vst [vmem:[#allocation5 + $0x2d8] sm:$0xff] %v1377
    %1506 = vst [vmem:[#allocation5 + $0x2e0] sm:$0xff] %v1378
    %1507 = vst [vmem:[#allocation5 + $0x2e8] sm:$0xff] %v1379
    %1508 = vst [vmem:[#allocation5 + $0x2f0] sm:$0xff] %v1380
    %1509 = vst [vmem:[#allocation5 + $0x2f8] sm:$0xff] %v1381
    %1510 = vst [vmem:[#allocation5 + $0x300] sm:$0xff] %v1382
    %1511 = vst [vmem:[#allocation5 + $0x308] sm:$0xff] %v1383
    %1512 = vst [vmem:[#allocation5 + $0x310] sm:$0xff] %v1384
    %1513 = vst [vmem:[#allocation5 + $0x318] sm:$0xff] %v1385
    %1514 = vst [vmem:[#allocation5 + $0x320] sm:$0xff] %v1386
    %1515 = vst [vmem:[#allocation5 + $0x328] sm:$0xff] %v1387
    %1516 = vst [vmem:[#allocation5 + $0x330] sm:$0xff] %v1388
    %1517 = vst [vmem:[#allocation5 + $0x338] sm:$0xff] %v1389
    %1518 = vst [vmem:[#allocation5 + $0x340] sm:$0xff] %v1390
    %1519 = vst [vmem:[#allocation5 + $0x348] sm:$0xff] %v1391
    %1520 = vst [vmem:[#allocation5 + $0x350] sm:$0xff] %v1392
    %1521 = vst [vmem:[#allocation5 + $0x358] sm:$0xff] %v1393
    %1522 = vst [vmem:[#allocation5 + $0x360] sm:$0xff] %v1394
    %1523 = vst [vmem:[#allocation5 + $0x368] sm:$0xff] %v1395
    %1524 = vst [vmem:[#allocation5 + $0x370] sm:$0xff] %v1396
    %1525 = vst [vmem:[#allocation5 + $0x378] sm:$0xff] %v1397
    %1526 = vst [vmem:[#allocation5 + $0x380] sm:$0xff] %v1398
    %1527 = vst [vmem:[#allocation5 + $0x388] sm:$0xff] %v1399
    %1528 = vst [vmem:[#allocation5 + $0x390] sm:$0xff] %v1400
    %1529 = vst [vmem:[#allocation5 + $0x398] sm:$0xff] %v1401
    %1530 = vst [vmem:[#allocation5 + $0x3a0] sm:$0xff] %v1402
    %1531 = vst [vmem:[#allocation5 + $0x3a8] sm:$0xff] %v1403
    %1532 = vst [vmem:[#allocation5 + $0x3b0] sm:$0xff] %v1404
    %1533 = vst [vmem:[#allocation5 + $0x3b8] sm:$0xff] %v1405
    %1534 = vst [vmem:[#allocation5 + $0x3c0] sm:$0xff] %v1406
    %1535 = vst [vmem:[#allocation5 + $0x3c8] sm:$0xff] %v1407
    %1536 = vst [vmem:[#allocation5 + $0x3d0] sm:$0xff] %v1408
    %1537 = vst [vmem:[#allocation5 + $0x3d8] sm:$0xff] %v1409
    %1538 = vst [vmem:[#allocation5 + $0x3e0] sm:$0xff] %v1410
    %1539 = vst [vmem:[#allocation5 + $0x3e8] sm:$0xff] %v1411
    %1540 = vst [vmem:[#allocation5 + $0x3f0] sm:$0xff] %v1412
    %1541 = vst [vmem:[#allocation5 + $0x3f8] sm:$0xff] %v1413
    // Predicated region
    $region26: #{tpu_custom_call.1} parent=1 // pred_check
      _
    $region27: #{tpu_custom_call.1} parent=1 // pred_check_branch
      %1543 = sbr.rel (0) target = $region29
    $region28: #{tpu_custom_call.1} parent=1 // pred_region
      %s1545 = ssub.s32 16384, 16384
      %1546 = vsyncadd [#allocation4], %s1545
      %s1547 = sshll.u32 [#allocation5], 4
      %s1548 = int_to_ptr.vmem [resolvable:$true] %s1547
      %1553 = dma.vmem_to_hbm [thread:$0]  %s1548, 16384, %s5, [#allocation4], 256, 256, 16
    $region29: #{tpu_custom_call.1} parent=1 // pred_fallthru
      _
    // Predicated region
    $region30: #{tpu_custom_call.1} parent=1 // pred_check
      _
    $region31: #{tpu_custom_call.1} parent=1 // pred_check_branch
      %1555 = sbr.rel (0) target = $region33
    $region32: #{tpu_custom_call.1} parent=1 // pred_region
      %1556 = dma.done [#allocation4], 16384
    $region33: #{tpu_custom_call.1} parent=1 // pred_fallthru
      _
    %1557 = vsyncpa [#allocation3], 1
    %1558 = vsyncpa [#allocation4], 1

</llo_original>
